<compile_context>
chip_gen: v5e
topology: v5e:2x2
jax: 0.10.0
libtpu: 0.0.40
codegen_flags: <defaults>
</compile_context>

<pallas_src>
import functools

import jax
import jax.numpy as jnp
from jax.experimental import pallas as pl
from jax.experimental.pallas import tpu as pltpu  # noqa: F401  (kept for TPU-specific tuning hooks)


def _round_up(n, m):
    return ((n + m - 1) // m) * m


def _param_offsets(n_input, n_hidden):
    """Sublane(8)-aligned row offsets of each parameter inside the packed slab."""
    r1 = _round_up(n_input, 8)               # w_hh1^T  rows [r1, r1+H)
    r2 = r1 + _round_up(n_hidden, 8)         # b1       row  r2
    r3 = r2 + 8                              # w_ih2^T  rows [r3, r3+H), cols [0,4)
    r4 = r3 + _round_up(n_hidden, 8)         # w_hh2^T  row  r4,         cols [0,4)
                                             # b2       row  r4+1,       cols [0,4)
    rows = r4 + 8
    return r1, r2, r3, r4, rows


def _lstm_kernel(x_ref, p_ref, out_ref, *, T, B, I, H):
    r1, r2, r3, r4, _ = _param_offsets(I, H)
    W = out_ref.shape[1]
    f32 = jnp.float32

    # ---- Unpack the single packed parameter slab (static, aligned slices). ----
    wih1 = p_ref[0:I, :]                    # (I, 4H)
    whh1 = p_ref[r1:r1 + H, :]              # (H, 4H)  resident recurrent weights
    b1 = p_ref[r2:r2 + 1, :]                # (1, 4H)  (b_ih1 + b_hh1)
    wih2 = p_ref[r3:r3 + H, 0:4]            # (H, 4)
    whh2 = p_ref[r4:r4 + 1, 0:4]            # (1, 4)
    b2 = p_ref[r4 + 1:r4 + 2, 0:4]          # (1, 4)   (b_ih2 + b_hh2)

    # ---- Layer-1 input projection for the whole sequence, hoisted off the
    # serial chain: one (T*B, I) x (I, 4H) MXU matmul. Gate order i|f|g|o. ----
    xg1 = jnp.dot(x_ref[...], wih1, preferred_element_type=f32) + b1   # (T*B, 4H)

    # Prediction accumulator: lane-dense (B, W) value kept in vregs; column t of
    # [0, T) holds step-t's prediction (per-step VPU lane-select, no stores).
    col = jax.lax.broadcasted_iota(jnp.int32, (B, W), 1)
    slab = jnp.zeros((B, W), f32)

    h1 = jnp.zeros((B, H), f32)
    c1 = jnp.zeros((B, H), f32)
    h2 = jnp.zeros((B, 1), f32)
    c2 = jnp.zeros((B, 1), f32)

    # ---- Fused, fully-unrolled recurrence. Layer 1's h1 @ whh1 is the only
    # MXU work on the critical chain; layer 2 (hidden size 1) plus the lane
    # select are off-chain filler that hides under the next step's matmul. ----
    # TODO(synk): whh1 could additionally be held in the MXU weight staging
    # registers across steps (pltpu.matmul_push_rhs/acc_lhs/pop); kept as
    # jnp.dot here for robust lowering.
    for t in range(T):
        # Layer 1: LSTM(n_input -> n_hidden)
        g1 = xg1[t * B:(t + 1) * B, :] + jnp.dot(h1, whh1,
                                                 preferred_element_type=f32)
        s1 = jax.nn.sigmoid(g1)                 # one EUP pass over the gate tile
        c1 = s1[:, H:2 * H] * c1 + s1[:, 0:H] * jnp.tanh(g1[:, 2 * H:3 * H])
        h1 = s1[:, 3 * H:4 * H] * jnp.tanh(c1)

        # Layer 2: LSTM(n_hidden -> 1); hidden=1 => recurrent term is a broadcast.
        g2 = jnp.dot(h1, wih2, preferred_element_type=f32) + b2 + h2 * whh2  # (B, 4)
        s2 = jax.nn.sigmoid(g2)
        c2 = s2[:, 1:2] * c2 + s2[:, 0:1] * jnp.tanh(g2[:, 2:3])
        h2 = s2[:, 3:4] * jnp.tanh(c2)

        slab = jnp.where(col == t, h2, slab)    # record prediction in column t

    # ---- Single packed output: one full-width lane-dense store (preds + zero
    # padding), then the final states dropped in at fixed column offsets.
    # One output array => one HBM writeback DMA for everything. ----
    out_ref[...] = slab
    out_ref[:, T:T + H] = h1
    out_ref[:, T + H:T + 2 * H] = c1
    out_ref[:, T + 2 * H:T + 2 * H + 1] = h2
    out_ref[:, T + 2 * H + 1:T + 2 * H + 2] = c2


def pack_params(p):
    """Pack all LSTM parameters into one sublane-aligned (rows, 4H) f32 slab."""
    I = p["w_ih1"].shape[1]
    H = p["w_hh1"].shape[1]
    r1, r2, r3, r4, rows = _param_offsets(I, H)
    slab = jnp.zeros((rows, 4 * H), jnp.float32)
    slab = slab.at[0:I, :].set(p["w_ih1"].T)                        # (I, 4H)
    slab = slab.at[r1:r1 + H, :].set(p["w_hh1"].T)                  # (H, 4H)
    slab = slab.at[r2, :].set(p["b_ih1"] + p["b_hh1"])              # (4H,)
    slab = slab.at[r3:r3 + H, 0:4].set(p["w_ih2"].T)                # (H, 4)
    slab = slab.at[r4, 0:4].set(p["w_hh2"].reshape(4))              # (4,)
    slab = slab.at[r4 + 1, 0:4].set(p["b_ih2"] + p["b_hh2"])        # (4,)
    return slab


@jax.jit
def lstm_forward(sequence, params_slab):
    """sequence: (T, B, I) float32. Returns (out (T,B,1), ((h1,c1),(h2,c2)))."""
    # TODO(synk): optional `given_hidden_state` (PyTorch arg) not wired; pass
    # h0/c0 in the params slab instead of the in-kernel zeros init if needed.
    T, B, I = sequence.shape
    H = params_slab.shape[1] // 4
    W = max(128, _round_up(T + 2 * H + 2, 128))   # packed-output lane width
    x2d = sequence.reshape(T * B, I).astype(jnp.float32)   # step t -> rows [t*B,(t+1)*B)

    flops = (2 * T * B * I * 4 * H            # hoisted layer-1 input projection
             + T * 2 * B * H * 4 * H          # layer-1 recurrent matmuls
             + T * 2 * B * H * 4              # layer-2 input projection
             + 12 * T * B * (H + 1))          # elementwise cell updates
    transcendentals = T * B * (6 * H + 6)     # sigmoid + tanh lanes, both layers
    bytes_accessed = 4 * (T * B * I + params_slab.size + B * W)

    slab = pl.pallas_call(
        functools.partial(_lstm_kernel, T=T, B=B, I=I, H=H),
        out_shape=jax.ShapeDtypeStruct((B, W), jnp.float32),
        # No grid: whole KB-scale problem in VMEM; recurrence runs in one shot.
        cost_estimate=pl.CostEstimate(flops=flops,
                                      transcendentals=transcendentals,
                                      bytes_accessed=bytes_accessed),
    )(x2d, params_slab)

    out = slab[:, 0:T].T[:, :, None].astype(sequence.dtype)         # (T, B, 1)
    # Match PyTorch's (num_layers*dirs, B, H) hidden-state layout.
    h1 = slab[:, T:T + H][None]
    c1 = slab[:, T + H:T + 2 * H][None]
    h2 = slab[:, T + 2 * H:T + 2 * H + 1][None]
    c2 = slab[:, T + 2 * H + 1:T + 2 * H + 2][None]
    return out, ((h1, c1), (h2, c2))


# ------------------------- pure-JAX reference -------------------------
def _cell_ref(x, h, c, w_ih, w_hh, b_ih, b_hh):
    H = h.shape[-1]
    g = x @ w_ih.T + h @ w_hh.T + b_ih + b_hh
    i = jax.nn.sigmoid(g[:, 0 * H:1 * H])
    f = jax.nn.sigmoid(g[:, 1 * H:2 * H])
    gg = jnp.tanh(g[:, 2 * H:3 * H])
    o = jax.nn.sigmoid(g[:, 3 * H:4 * H])
    c_new = f * c + i * gg
    h_new = o * jnp.tanh(c_new)
    return h_new, c_new


def lstm_reference(sequence, p):
    T, B, _ = sequence.shape
    H = p["w_hh1"].shape[1]
    h1 = jnp.zeros((B, H)); c1 = jnp.zeros((B, H))
    h2 = jnp.zeros((B, 1)); c2 = jnp.zeros((B, 1))
    outs = []
    for t in range(T):
        h1, c1 = _cell_ref(sequence[t], h1, c1,
                           p["w_ih1"], p["w_hh1"], p["b_ih1"], p["b_hh1"])
        h2, c2 = _cell_ref(h1, h2, c2,
                           p["w_ih2"], p["w_hh2"], p["b_ih2"], p["b_hh2"])
        outs.append(h2)
    return jnp.stack(outs), ((h1, c1), (h2, c2))


def init_params(key, n_input, n_hidden):
    """Deterministic init mimicking PyTorch's U(-1/sqrt(H), 1/sqrt(H))."""
    ks = jax.random.split(key, 8)
    k1 = 1.0 / jnp.sqrt(jnp.float32(n_hidden))
    k2 = 1.0  # hidden size of lstm2 is 1
    u = lambda k, shape, s: jax.random.uniform(k, shape, jnp.float32, -s, s)
    return {
        "w_ih1": u(ks[0], (4 * n_hidden, n_input), k1),
        "w_hh1": u(ks[1], (4 * n_hidden, n_hidden), k1),
        "b_ih1": u(ks[2], (4 * n_hidden,), k1),
        "b_hh1": u(ks[3], (4 * n_hidden,), k1),
        "w_ih2": u(ks[4], (4 * 1, n_hidden), k2),
        "w_hh2": u(ks[5], (4 * 1, 1), k2),
        "b_ih2": u(ks[6], (4 * 1,), k2),
        "b_hh2": u(ks[7], (4 * 1,), k2),
    }


if __name__ == "__main__":
    T, B, n_input, n_hidden = 8, 2, 4, 32

    key = jax.random.PRNGKey(0)
    k_seq, k_par = jax.random.split(key)
    sequence = jax.random.normal(k_seq, (T, B, n_input), jnp.float32)
    p = init_params(k_par, n_input, n_hidden)

    params_slab = pack_params(p)

    out, ((h1, c1), (h2, c2)) = jax.block_until_ready(
        lstm_forward(sequence, params_slab))

    ref_out, ((rh1, rc1), (rh2, rc2)) = lstm_reference(sequence, p)

    assert out.shape == (T, B, 1)
    assert jnp.allclose(out, ref_out, atol=1e-5, rtol=1e-5)
    assert jnp.allclose(h1[0], rh1, atol=1e-5, rtol=1e-5)
    assert jnp.allclose(c1[0], rc1, atol=1e-5, rtol=1e-5)
    assert jnp.allclose(h2[0], rh2, atol=1e-5, rtol=1e-5)
    assert jnp.allclose(c2[0], rc2, atol=1e-5, rtol=1e-5)

    print("KERNEL_OK")
</pallas_src>

<mosaic_0001>
module attributes {stable_mosaic.version = 11 : i64} {
  func.func @_lstm_kernel(%arg0: memref<16x4xf32, #tpu.memory_space<vmem>>, %arg1: memref<88x128xf32, #tpu.memory_space<vmem>>, %arg2: memref<2x128xf32, #tpu.memory_space<vmem>>) attributes {dimension_semantics = [], scalar_prefetch = 0 : i64, scratch_operands = 0 : i64, tpu.core_type = #tpu.core_type<tc>} {
    %c0 = arith.constant 0 : index
    %c0_0 = arith.constant 0 : index
    %0 = vector.load %arg1[%c0, %c0_0] : memref<88x128xf32, #tpu.memory_space<vmem>>, vector<4x128xf32>
    %c8 = arith.constant 8 : index
    %c0_1 = arith.constant 0 : index
    %1 = vector.load %arg1[%c8, %c0_1] : memref<88x128xf32, #tpu.memory_space<vmem>>, vector<32x128xf32>
    %c40 = arith.constant 40 : index
    %c0_2 = arith.constant 0 : index
    %2 = vector.load %arg1[%c40, %c0_2] : memref<88x128xf32, #tpu.memory_space<vmem>>, vector<1x128xf32>
    %c48 = arith.constant 48 : index
    %c0_3 = arith.constant 0 : index
    %3 = vector.load %arg1[%c48, %c0_3] : memref<88x128xf32, #tpu.memory_space<vmem>>, vector<32x4xf32>
    %c80 = arith.constant 80 : index
    %c0_4 = arith.constant 0 : index
    %4 = vector.load %arg1[%c80, %c0_4] : memref<88x128xf32, #tpu.memory_space<vmem>>, vector<1x4xf32>
    %c81 = arith.constant 81 : index
    %c0_5 = arith.constant 0 : index
    %5 = vector.load %arg1[%c81, %c0_5] : memref<88x128xf32, #tpu.memory_space<vmem>>, vector<1x4xf32>
    %c0_6 = arith.constant 0 : index
    %c0_7 = arith.constant 0 : index
    %6 = vector.load %arg0[%c0_6, %c0_7] : memref<16x4xf32, #tpu.memory_space<vmem>>, vector<16x4xf32>
    %cst = arith.constant dense<0.000000e+00> : vector<16x128xf32>
    %7 = tpu.matmul %6, %0, %cst {dimension_numbers = #tpu.dot_dimension_numbers<[1], [0], [0], [1], [0, 0, 1, 1], [], []>} : vector<16x4xf32>, vector<4x128xf32>, vector<16x128xf32> -> vector<16x128xf32>
    %8 = vector.broadcast %2 : vector<1x128xf32> to vector<16x128xf32>
    %9 = arith.addf %7, %8 : vector<16x128xf32>
    %10 = tpu.iota {dimensions = array<i32: 1>} : vector<2x128xi32>
    %cst_8 = arith.constant 0.000000e+00 : f32
    %11 = vector.broadcast %cst_8 : f32 to vector<2x128xf32>
    %cst_9 = arith.constant 0.000000e+00 : f32
    %12 = vector.broadcast %cst_9 : f32 to vector<2x32xf32>
    %cst_10 = arith.constant 0.000000e+00 : f32
    %13 = vector.broadcast %cst_10 : f32 to vector<2x32xf32>
    %cst_11 = arith.constant 0.000000e+00 : f32
    %14 = vector.broadcast %cst_11 : f32 to vector<2x1xf32>
    %cst_12 = arith.constant 0.000000e+00 : f32
    %15 = vector.broadcast %cst_12 : f32 to vector<2x1xf32>
    %16 = vector.extract_strided_slice %9 {offsets = [0, 0], sizes = [2, 128], strides = [1, 1]} : vector<16x128xf32> to vector<2x128xf32>
    %cst_13 = arith.constant dense<0.000000e+00> : vector<2x128xf32>
    %17 = tpu.matmul %12, %1, %cst_13 {dimension_numbers = #tpu.dot_dimension_numbers<[1], [0], [0], [1], [0, 0, 1, 1], [], []>} : vector<2x32xf32>, vector<32x128xf32>, vector<2x128xf32> -> vector<2x128xf32>
    %18 = arith.addf %16, %17 : vector<2x128xf32>
    %19 = arith.negf %18 : vector<2x128xf32>
    %20 = math.exp %19 : vector<2x128xf32>
    %cst_14 = arith.constant 1.000000e+00 : f32
    %21 = vector.broadcast %cst_14 : f32 to vector<2x128xf32>
    %22 = arith.addf %21, %20 : vector<2x128xf32>
    %23 = arith.divf %21, %22 : vector<2x128xf32>
    %24 = vector.extract_strided_slice %23 {offsets = [0, 32], sizes = [2, 32], strides = [1, 1]} : vector<2x128xf32> to vector<2x32xf32>
    %25 = arith.mulf %24, %13 : vector<2x32xf32>
    %26 = vector.extract_strided_slice %23 {offsets = [0, 0], sizes = [2, 32], strides = [1, 1]} : vector<2x128xf32> to vector<2x32xf32>
    %27 = vector.extract_strided_slice %18 {offsets = [0, 64], sizes = [2, 32], strides = [1, 1]} : vector<2x128xf32> to vector<2x32xf32>
    %28 = math.tanh %27 : vector<2x32xf32>
    %29 = arith.mulf %26, %28 : vector<2x32xf32>
    %30 = arith.addf %25, %29 : vector<2x32xf32>
    %31 = vector.extract_strided_slice %23 {offsets = [0, 96], sizes = [2, 32], strides = [1, 1]} : vector<2x128xf32> to vector<2x32xf32>
    %32 = math.tanh %30 : vector<2x32xf32>
    %33 = arith.mulf %31, %32 : vector<2x32xf32>
    %cst_15 = arith.constant dense<0.000000e+00> : vector<2x4xf32>
    %34 = tpu.matmul %33, %3, %cst_15 {dimension_numbers = #tpu.dot_dimension_numbers<[1], [0], [0], [1], [0, 0, 1, 1], [], []>} : vector<2x32xf32>, vector<32x4xf32>, vector<2x4xf32> -> vector<2x4xf32>
    %35 = vector.broadcast %5 : vector<1x4xf32> to vector<2x4xf32>
    %36 = arith.addf %34, %35 : vector<2x4xf32>
    %37 = vector.broadcast %14 : vector<2x1xf32> to vector<2x4xf32>
    %38 = vector.broadcast %4 : vector<1x4xf32> to vector<2x4xf32>
    %39 = arith.mulf %37, %38 : vector<2x4xf32>
    %40 = arith.addf %36, %39 : vector<2x4xf32>
    %41 = arith.negf %40 : vector<2x4xf32>
    %42 = math.exp %41 : vector<2x4xf32>
    %cst_16 = arith.constant 1.000000e+00 : f32
    %43 = vector.broadcast %cst_16 : f32 to vector<2x4xf32>
    %44 = arith.addf %43, %42 : vector<2x4xf32>
    %45 = arith.divf %43, %44 : vector<2x4xf32>
    %46 = vector.extract_strided_slice %45 {offsets = [0, 1], sizes = [2, 1], strides = [1, 1]} : vector<2x4xf32> to vector<2x1xf32>
    %47 = arith.mulf %46, %15 : vector<2x1xf32>
    %48 = vector.extract_strided_slice %45 {offsets = [0, 0], sizes = [2, 1], strides = [1, 1]} : vector<2x4xf32> to vector<2x1xf32>
    %49 = vector.extract_strided_slice %40 {offsets = [0, 2], sizes = [2, 1], strides = [1, 1]} : vector<2x4xf32> to vector<2x1xf32>
    %50 = math.tanh %49 : vector<2x1xf32>
    %51 = arith.mulf %48, %50 : vector<2x1xf32>
    %52 = arith.addf %47, %51 : vector<2x1xf32>
    %53 = vector.extract_strided_slice %45 {offsets = [0, 3], sizes = [2, 1], strides = [1, 1]} : vector<2x4xf32> to vector<2x1xf32>
    %54 = math.tanh %52 : vector<2x1xf32>
    %55 = arith.mulf %53, %54 : vector<2x1xf32>
    %c0_i32 = arith.constant 0 : i32
    %56 = vector.broadcast %c0_i32 : i32 to vector<2x128xi32>
    %57 = arith.cmpi eq, %10, %56 : vector<2x128xi32>
    %58 = vector.shape_cast %55 : vector<2x1xf32> to vector<2x1xf32>
    %59 = vector.broadcast %58 : vector<2x1xf32> to vector<2x128xf32>
    %60 = arith.select %57, %59, %11 : vector<2x128xi1>, vector<2x128xf32>
    %61 = vector.extract_strided_slice %9 {offsets = [2, 0], sizes = [2, 128], strides = [1, 1]} : vector<16x128xf32> to vector<2x128xf32>
    %cst_17 = arith.constant dense<0.000000e+00> : vector<2x128xf32>
    %62 = tpu.matmul %33, %1, %cst_17 {dimension_numbers = #tpu.dot_dimension_numbers<[1], [0], [0], [1], [0, 0, 1, 1], [], []>} : vector<2x32xf32>, vector<32x128xf32>, vector<2x128xf32> -> vector<2x128xf32>
    %63 = arith.addf %61, %62 : vector<2x128xf32>
    %64 = arith.negf %63 : vector<2x128xf32>
    %65 = math.exp %64 : vector<2x128xf32>
    %cst_18 = arith.constant 1.000000e+00 : f32
    %66 = vector.broadcast %cst_18 : f32 to vector<2x128xf32>
    %67 = arith.addf %66, %65 : vector<2x128xf32>
    %68 = arith.divf %66, %67 : vector<2x128xf32>
    %69 = vector.extract_strided_slice %68 {offsets = [0, 32], sizes = [2, 32], strides = [1, 1]} : vector<2x128xf32> to vector<2x32xf32>
    %70 = arith.mulf %69, %30 : vector<2x32xf32>
    %71 = vector.extract_strided_slice %68 {offsets = [0, 0], sizes = [2, 32], strides = [1, 1]} : vector<2x128xf32> to vector<2x32xf32>
    %72 = vector.extract_strided_slice %63 {offsets = [0, 64], sizes = [2, 32], strides = [1, 1]} : vector<2x128xf32> to vector<2x32xf32>
    %73 = math.tanh %72 : vector<2x32xf32>
    %74 = arith.mulf %71, %73 : vector<2x32xf32>
    %75 = arith.addf %70, %74 : vector<2x32xf32>
    %76 = vector.extract_strided_slice %68 {offsets = [0, 96], sizes = [2, 32], strides = [1, 1]} : vector<2x128xf32> to vector<2x32xf32>
    %77 = math.tanh %75 : vector<2x32xf32>
    %78 = arith.mulf %76, %77 : vector<2x32xf32>
    %cst_19 = arith.constant dense<0.000000e+00> : vector<2x4xf32>
    %79 = tpu.matmul %78, %3, %cst_19 {dimension_numbers = #tpu.dot_dimension_numbers<[1], [0], [0], [1], [0, 0, 1, 1], [], []>} : vector<2x32xf32>, vector<32x4xf32>, vector<2x4xf32> -> vector<2x4xf32>
    %80 = vector.broadcast %5 : vector<1x4xf32> to vector<2x4xf32>
    %81 = arith.addf %79, %80 : vector<2x4xf32>
    %82 = vector.broadcast %55 : vector<2x1xf32> to vector<2x4xf32>
    %83 = vector.broadcast %4 : vector<1x4xf32> to vector<2x4xf32>
    %84 = arith.mulf %82, %83 : vector<2x4xf32>
    %85 = arith.addf %81, %84 : vector<2x4xf32>
    %86 = arith.negf %85 : vector<2x4xf32>
    %87 = math.exp %86 : vector<2x4xf32>
    %cst_20 = arith.constant 1.000000e+00 : f32
    %88 = vector.broadcast %cst_20 : f32 to vector<2x4xf32>
    %89 = arith.addf %88, %87 : vector<2x4xf32>
    %90 = arith.divf %88, %89 : vector<2x4xf32>
    %91 = vector.extract_strided_slice %90 {offsets = [0, 1], sizes = [2, 1], strides = [1, 1]} : vector<2x4xf32> to vector<2x1xf32>
    %92 = arith.mulf %91, %52 : vector<2x1xf32>
    %93 = vector.extract_strided_slice %90 {offsets = [0, 0], sizes = [2, 1], strides = [1, 1]} : vector<2x4xf32> to vector<2x1xf32>
    %94 = vector.extract_strided_slice %85 {offsets = [0, 2], sizes = [2, 1], strides = [1, 1]} : vector<2x4xf32> to vector<2x1xf32>
    %95 = math.tanh %94 : vector<2x1xf32>
    %96 = arith.mulf %93, %95 : vector<2x1xf32>
    %97 = arith.addf %92, %96 : vector<2x1xf32>
    %98 = vector.extract_strided_slice %90 {offsets = [0, 3], sizes = [2, 1], strides = [1, 1]} : vector<2x4xf32> to vector<2x1xf32>
    %99 = math.tanh %97 : vector<2x1xf32>
    %100 = arith.mulf %98, %99 : vector<2x1xf32>
    %c1_i32 = arith.constant 1 : i32
    %101 = vector.broadcast %c1_i32 : i32 to vector<2x128xi32>
    %102 = arith.cmpi eq, %10, %101 : vector<2x128xi32>
    %103 = vector.shape_cast %100 : vector<2x1xf32> to vector<2x1xf32>
    %104 = vector.broadcast %103 : vector<2x1xf32> to vector<2x128xf32>
    %105 = arith.select %102, %104, %60 : vector<2x128xi1>, vector<2x128xf32>
    %106 = vector.extract_strided_slice %9 {offsets = [4, 0], sizes = [2, 128], strides = [1, 1]} : vector<16x128xf32> to vector<2x128xf32>
    %cst_21 = arith.constant dense<0.000000e+00> : vector<2x128xf32>
    %107 = tpu.matmul %78, %1, %cst_21 {dimension_numbers = #tpu.dot_dimension_numbers<[1], [0], [0], [1], [0, 0, 1, 1], [], []>} : vector<2x32xf32>, vector<32x128xf32>, vector<2x128xf32> -> vector<2x128xf32>
    %108 = arith.addf %106, %107 : vector<2x128xf32>
    %109 = arith.negf %108 : vector<2x128xf32>
    %110 = math.exp %109 : vector<2x128xf32>
    %cst_22 = arith.constant 1.000000e+00 : f32
    %111 = vector.broadcast %cst_22 : f32 to vector<2x128xf32>
    %112 = arith.addf %111, %110 : vector<2x128xf32>
    %113 = arith.divf %111, %112 : vector<2x128xf32>
    %114 = vector.extract_strided_slice %113 {offsets = [0, 32], sizes = [2, 32], strides = [1, 1]} : vector<2x128xf32> to vector<2x32xf32>
    %115 = arith.mulf %114, %75 : vector<2x32xf32>
    %116 = vector.extract_strided_slice %113 {offsets = [0, 0], sizes = [2, 32], strides = [1, 1]} : vector<2x128xf32> to vector<2x32xf32>
    %117 = vector.extract_strided_slice %108 {offsets = [0, 64], sizes = [2, 32], strides = [1, 1]} : vector<2x128xf32> to vector<2x32xf32>
    %118 = math.tanh %117 : vector<2x32xf32>
    %119 = arith.mulf %116, %118 : vector<2x32xf32>
    %120 = arith.addf %115, %119 : vector<2x32xf32>
    %121 = vector.extract_strided_slice %113 {offsets = [0, 96], sizes = [2, 32], strides = [1, 1]} : vector<2x128xf32> to vector<2x32xf32>
    %122 = math.tanh %120 : vector<2x32xf32>
    %123 = arith.mulf %121, %122 : vector<2x32xf32>
    %cst_23 = arith.constant dense<0.000000e+00> : vector<2x4xf32>
    %124 = tpu.matmul %123, %3, %cst_23 {dimension_numbers = #tpu.dot_dimension_numbers<[1], [0], [0], [1], [0, 0, 1, 1], [], []>} : vector<2x32xf32>, vector<32x4xf32>, vector<2x4xf32> -> vector<2x4xf32>
    %125 = vector.broadcast %5 : vector<1x4xf32> to vector<2x4xf32>
    %126 = arith.addf %124, %125 : vector<2x4xf32>
    %127 = vector.broadcast %100 : vector<2x1xf32> to vector<2x4xf32>
    %128 = vector.broadcast %4 : vector<1x4xf32> to vector<2x4xf32>
    %129 = arith.mulf %127, %128 : vector<2x4xf32>
    %130 = arith.addf %126, %129 : vector<2x4xf32>
    %131 = arith.negf %130 : vector<2x4xf32>
    %132 = math.exp %131 : vector<2x4xf32>
    %cst_24 = arith.constant 1.000000e+00 : f32
    %133 = vector.broadcast %cst_24 : f32 to vector<2x4xf32>
    %134 = arith.addf %133, %132 : vector<2x4xf32>
    %135 = arith.divf %133, %134 : vector<2x4xf32>
    %136 = vector.extract_strided_slice %135 {offsets = [0, 1], sizes = [2, 1], strides = [1, 1]} : vector<2x4xf32> to vector<2x1xf32>
    %137 = arith.mulf %136, %97 : vector<2x1xf32>
    %138 = vector.extract_strided_slice %135 {offsets = [0, 0], sizes = [2, 1], strides = [1, 1]} : vector<2x4xf32> to vector<2x1xf32>
    %139 = vector.extract_strided_slice %130 {offsets = [0, 2], sizes = [2, 1], strides = [1, 1]} : vector<2x4xf32> to vector<2x1xf32>
    %140 = math.tanh %139 : vector<2x1xf32>
    %141 = arith.mulf %138, %140 : vector<2x1xf32>
    %142 = arith.addf %137, %141 : vector<2x1xf32>
    %143 = vector.extract_strided_slice %135 {offsets = [0, 3], sizes = [2, 1], strides = [1, 1]} : vector<2x4xf32> to vector<2x1xf32>
    %144 = math.tanh %142 : vector<2x1xf32>
    %145 = arith.mulf %143, %144 : vector<2x1xf32>
    %c2_i32 = arith.constant 2 : i32
    %146 = vector.broadcast %c2_i32 : i32 to vector<2x128xi32>
    %147 = arith.cmpi eq, %10, %146 : vector<2x128xi32>
    %148 = vector.shape_cast %145 : vector<2x1xf32> to vector<2x1xf32>
    %149 = vector.broadcast %148 : vector<2x1xf32> to vector<2x128xf32>
    %150 = arith.select %147, %149, %105 : vector<2x128xi1>, vector<2x128xf32>
    %151 = vector.extract_strided_slice %9 {offsets = [6, 0], sizes = [2, 128], strides = [1, 1]} : vector<16x128xf32> to vector<2x128xf32>
    %cst_25 = arith.constant dense<0.000000e+00> : vector<2x128xf32>
    %152 = tpu.matmul %123, %1, %cst_25 {dimension_numbers = #tpu.dot_dimension_numbers<[1], [0], [0], [1], [0, 0, 1, 1], [], []>} : vector<2x32xf32>, vector<32x128xf32>, vector<2x128xf32> -> vector<2x128xf32>
    %153 = arith.addf %151, %152 : vector<2x128xf32>
    %154 = arith.negf %153 : vector<2x128xf32>
    %155 = math.exp %154 : vector<2x128xf32>
    %cst_26 = arith.constant 1.000000e+00 : f32
    %156 = vector.broadcast %cst_26 : f32 to vector<2x128xf32>
    %157 = arith.addf %156, %155 : vector<2x128xf32>
    %158 = arith.divf %156, %157 : vector<2x128xf32>
    %159 = vector.extract_strided_slice %158 {offsets = [0, 32], sizes = [2, 32], strides = [1, 1]} : vector<2x128xf32> to vector<2x32xf32>
    %160 = arith.mulf %159, %120 : vector<2x32xf32>
    %161 = vector.extract_strided_slice %158 {offsets = [0, 0], sizes = [2, 32], strides = [1, 1]} : vector<2x128xf32> to vector<2x32xf32>
    %162 = vector.extract_strided_slice %153 {offsets = [0, 64], sizes = [2, 32], strides = [1, 1]} : vector<2x128xf32> to vector<2x32xf32>
    %163 = math.tanh %162 : vector<2x32xf32>
    %164 = arith.mulf %161, %163 : vector<2x32xf32>
    %165 = arith.addf %160, %164 : vector<2x32xf32>
    %166 = vector.extract_strided_slice %158 {offsets = [0, 96], sizes = [2, 32], strides = [1, 1]} : vector<2x128xf32> to vector<2x32xf32>
    %167 = math.tanh %165 : vector<2x32xf32>
    %168 = arith.mulf %166, %167 : vector<2x32xf32>
    %cst_27 = arith.constant dense<0.000000e+00> : vector<2x4xf32>
    %169 = tpu.matmul %168, %3, %cst_27 {dimension_numbers = #tpu.dot_dimension_numbers<[1], [0], [0], [1], [0, 0, 1, 1], [], []>} : vector<2x32xf32>, vector<32x4xf32>, vector<2x4xf32> -> vector<2x4xf32>
    %170 = vector.broadcast %5 : vector<1x4xf32> to vector<2x4xf32>
    %171 = arith.addf %169, %170 : vector<2x4xf32>
    %172 = vector.broadcast %145 : vector<2x1xf32> to vector<2x4xf32>
    %173 = vector.broadcast %4 : vector<1x4xf32> to vector<2x4xf32>
    %174 = arith.mulf %172, %173 : vector<2x4xf32>
    %175 = arith.addf %171, %174 : vector<2x4xf32>
    %176 = arith.negf %175 : vector<2x4xf32>
    %177 = math.exp %176 : vector<2x4xf32>
    %cst_28 = arith.constant 1.000000e+00 : f32
    %178 = vector.broadcast %cst_28 : f32 to vector<2x4xf32>
    %179 = arith.addf %178, %177 : vector<2x4xf32>
    %180 = arith.divf %178, %179 : vector<2x4xf32>
    %181 = vector.extract_strided_slice %180 {offsets = [0, 1], sizes = [2, 1], strides = [1, 1]} : vector<2x4xf32> to vector<2x1xf32>
    %182 = arith.mulf %181, %142 : vector<2x1xf32>
    %183 = vector.extract_strided_slice %180 {offsets = [0, 0], sizes = [2, 1], strides = [1, 1]} : vector<2x4xf32> to vector<2x1xf32>
    %184 = vector.extract_strided_slice %175 {offsets = [0, 2], sizes = [2, 1], strides = [1, 1]} : vector<2x4xf32> to vector<2x1xf32>
    %185 = math.tanh %184 : vector<2x1xf32>
    %186 = arith.mulf %183, %185 : vector<2x1xf32>
    %187 = arith.addf %182, %186 : vector<2x1xf32>
    %188 = vector.extract_strided_slice %180 {offsets = [0, 3], sizes = [2, 1], strides = [1, 1]} : vector<2x4xf32> to vector<2x1xf32>
    %189 = math.tanh %187 : vector<2x1xf32>
    %190 = arith.mulf %188, %189 : vector<2x1xf32>
    %c3_i32 = arith.constant 3 : i32
    %191 = vector.broadcast %c3_i32 : i32 to vector<2x128xi32>
    %192 = arith.cmpi eq, %10, %191 : vector<2x128xi32>
    %193 = vector.shape_cast %190 : vector<2x1xf32> to vector<2x1xf32>
    %194 = vector.broadcast %193 : vector<2x1xf32> to vector<2x128xf32>
    %195 = arith.select %192, %194, %150 : vector<2x128xi1>, vector<2x128xf32>
    %196 = vector.extract_strided_slice %9 {offsets = [8, 0], sizes = [2, 128], strides = [1, 1]} : vector<16x128xf32> to vector<2x128xf32>
    %cst_29 = arith.constant dense<0.000000e+00> : vector<2x128xf32>
    %197 = tpu.matmul %168, %1, %cst_29 {dimension_numbers = #tpu.dot_dimension_numbers<[1], [0], [0], [1], [0, 0, 1, 1], [], []>} : vector<2x32xf32>, vector<32x128xf32>, vector<2x128xf32> -> vector<2x128xf32>
    %198 = arith.addf %196, %197 : vector<2x128xf32>
    %199 = arith.negf %198 : vector<2x128xf32>
    %200 = math.exp %199 : vector<2x128xf32>
    %cst_30 = arith.constant 1.000000e+00 : f32
    %201 = vector.broadcast %cst_30 : f32 to vector<2x128xf32>
    %202 = arith.addf %201, %200 : vector<2x128xf32>
    %203 = arith.divf %201, %202 : vector<2x128xf32>
    %204 = vector.extract_strided_slice %203 {offsets = [0, 32], sizes = [2, 32], strides = [1, 1]} : vector<2x128xf32> to vector<2x32xf32>
    %205 = arith.mulf %204, %165 : vector<2x32xf32>
    %206 = vector.extract_strided_slice %203 {offsets = [0, 0], sizes = [2, 32], strides = [1, 1]} : vector<2x128xf32> to vector<2x32xf32>
    %207 = vector.extract_strided_slice %198 {offsets = [0, 64], sizes = [2, 32], strides = [1, 1]} : vector<2x128xf32> to vector<2x32xf32>
    %208 = math.tanh %207 : vector<2x32xf32>
    %209 = arith.mulf %206, %208 : vector<2x32xf32>
    %210 = arith.addf %205, %209 : vector<2x32xf32>
    %211 = vector.extract_strided_slice %203 {offsets = [0, 96], sizes = [2, 32], strides = [1, 1]} : vector<2x128xf32> to vector<2x32xf32>
    %212 = math.tanh %210 : vector<2x32xf32>
    %213 = arith.mulf %211, %212 : vector<2x32xf32>
    %cst_31 = arith.constant dense<0.000000e+00> : vector<2x4xf32>
    %214 = tpu.matmul %213, %3, %cst_31 {dimension_numbers = #tpu.dot_dimension_numbers<[1], [0], [0], [1], [0, 0, 1, 1], [], []>} : vector<2x32xf32>, vector<32x4xf32>, vector<2x4xf32> -> vector<2x4xf32>
    %215 = vector.broadcast %5 : vector<1x4xf32> to vector<2x4xf32>
    %216 = arith.addf %214, %215 : vector<2x4xf32>
    %217 = vector.broadcast %190 : vector<2x1xf32> to vector<2x4xf32>
    %218 = vector.broadcast %4 : vector<1x4xf32> to vector<2x4xf32>
    %219 = arith.mulf %217, %218 : vector<2x4xf32>
    %220 = arith.addf %216, %219 : vector<2x4xf32>
    %221 = arith.negf %220 : vector<2x4xf32>
    %222 = math.exp %221 : vector<2x4xf32>
    %cst_32 = arith.constant 1.000000e+00 : f32
    %223 = vector.broadcast %cst_32 : f32 to vector<2x4xf32>
    %224 = arith.addf %223, %222 : vector<2x4xf32>
    %225 = arith.divf %223, %224 : vector<2x4xf32>
    %226 = vector.extract_strided_slice %225 {offsets = [0, 1], sizes = [2, 1], strides = [1, 1]} : vector<2x4xf32> to vector<2x1xf32>
    %227 = arith.mulf %226, %187 : vector<2x1xf32>
    %228 = vector.extract_strided_slice %225 {offsets = [0, 0], sizes = [2, 1], strides = [1, 1]} : vector<2x4xf32> to vector<2x1xf32>
    %229 = vector.extract_strided_slice %220 {offsets = [0, 2], sizes = [2, 1], strides = [1, 1]} : vector<2x4xf32> to vector<2x1xf32>
    %230 = math.tanh %229 : vector<2x1xf32>
    %231 = arith.mulf %228, %230 : vector<2x1xf32>
    %232 = arith.addf %227, %231 : vector<2x1xf32>
    %233 = vector.extract_strided_slice %225 {offsets = [0, 3], sizes = [2, 1], strides = [1, 1]} : vector<2x4xf32> to vector<2x1xf32>
    %234 = math.tanh %232 : vector<2x1xf32>
    %235 = arith.mulf %233, %234 : vector<2x1xf32>
    %c4_i32 = arith.constant 4 : i32
    %236 = vector.broadcast %c4_i32 : i32 to vector<2x128xi32>
    %237 = arith.cmpi eq, %10, %236 : vector<2x128xi32>
    %238 = vector.shape_cast %235 : vector<2x1xf32> to vector<2x1xf32>
    %239 = vector.broadcast %238 : vector<2x1xf32> to vector<2x128xf32>
    %240 = arith.select %237, %239, %195 : vector<2x128xi1>, vector<2x128xf32>
    %241 = vector.extract_strided_slice %9 {offsets = [10, 0], sizes = [2, 128], strides = [1, 1]} : vector<16x128xf32> to vector<2x128xf32>
    %cst_33 = arith.constant dense<0.000000e+00> : vector<2x128xf32>
    %242 = tpu.matmul %213, %1, %cst_33 {dimension_numbers = #tpu.dot_dimension_numbers<[1], [0], [0], [1], [0, 0, 1, 1], [], []>} : vector<2x32xf32>, vector<32x128xf32>, vector<2x128xf32> -> vector<2x128xf32>
    %243 = arith.addf %241, %242 : vector<2x128xf32>
    %244 = arith.negf %243 : vector<2x128xf32>
    %245 = math.exp %244 : vector<2x128xf32>
    %cst_34 = arith.constant 1.000000e+00 : f32
    %246 = vector.broadcast %cst_34 : f32 to vector<2x128xf32>
    %247 = arith.addf %246, %245 : vector<2x128xf32>
    %248 = arith.divf %246, %247 : vector<2x128xf32>
    %249 = vector.extract_strided_slice %248 {offsets = [0, 32], sizes = [2, 32], strides = [1, 1]} : vector<2x128xf32> to vector<2x32xf32>
    %250 = arith.mulf %249, %210 : vector<2x32xf32>
    %251 = vector.extract_strided_slice %248 {offsets = [0, 0], sizes = [2, 32], strides = [1, 1]} : vector<2x128xf32> to vector<2x32xf32>
    %252 = vector.extract_strided_slice %243 {offsets = [0, 64], sizes = [2, 32], strides = [1, 1]} : vector<2x128xf32> to vector<2x32xf32>
    %253 = math.tanh %252 : vector<2x32xf32>
    %254 = arith.mulf %251, %253 : vector<2x32xf32>
    %255 = arith.addf %250, %254 : vector<2x32xf32>
    %256 = vector.extract_strided_slice %248 {offsets = [0, 96], sizes = [2, 32], strides = [1, 1]} : vector<2x128xf32> to vector<2x32xf32>
    %257 = math.tanh %255 : vector<2x32xf32>
    %258 = arith.mulf %256, %257 : vector<2x32xf32>
    %cst_35 = arith.constant dense<0.000000e+00> : vector<2x4xf32>
    %259 = tpu.matmul %258, %3, %cst_35 {dimension_numbers = #tpu.dot_dimension_numbers<[1], [0], [0], [1], [0, 0, 1, 1], [], []>} : vector<2x32xf32>, vector<32x4xf32>, vector<2x4xf32> -> vector<2x4xf32>
    %260 = vector.broadcast %5 : vector<1x4xf32> to vector<2x4xf32>
    %261 = arith.addf %259, %260 : vector<2x4xf32>
    %262 = vector.broadcast %235 : vector<2x1xf32> to vector<2x4xf32>
    %263 = vector.broadcast %4 : vector<1x4xf32> to vector<2x4xf32>
    %264 = arith.mulf %262, %263 : vector<2x4xf32>
    %265 = arith.addf %261, %264 : vector<2x4xf32>
    %266 = arith.negf %265 : vector<2x4xf32>
    %267 = math.exp %266 : vector<2x4xf32>
    %cst_36 = arith.constant 1.000000e+00 : f32
    %268 = vector.broadcast %cst_36 : f32 to vector<2x4xf32>
    %269 = arith.addf %268, %267 : vector<2x4xf32>
    %270 = arith.divf %268, %269 : vector<2x4xf32>
    %271 = vector.extract_strided_slice %270 {offsets = [0, 1], sizes = [2, 1], strides = [1, 1]} : vector<2x4xf32> to vector<2x1xf32>
    %272 = arith.mulf %271, %232 : vector<2x1xf32>
    %273 = vector.extract_strided_slice %270 {offsets = [0, 0], sizes = [2, 1], strides = [1, 1]} : vector<2x4xf32> to vector<2x1xf32>
    %274 = vector.extract_strided_slice %265 {offsets = [0, 2], sizes = [2, 1], strides = [1, 1]} : vector<2x4xf32> to vector<2x1xf32>
    %275 = math.tanh %274 : vector<2x1xf32>
    %276 = arith.mulf %273, %275 : vector<2x1xf32>
    %277 = arith.addf %272, %276 : vector<2x1xf32>
    %278 = vector.extract_strided_slice %270 {offsets = [0, 3], sizes = [2, 1], strides = [1, 1]} : vector<2x4xf32> to vector<2x1xf32>
    %279 = math.tanh %277 : vector<2x1xf32>
    %280 = arith.mulf %278, %279 : vector<2x1xf32>
    %c5_i32 = arith.constant 5 : i32
    %281 = vector.broadcast %c5_i32 : i32 to vector<2x128xi32>
    %282 = arith.cmpi eq, %10, %281 : vector<2x128xi32>
    %283 = vector.shape_cast %280 : vector<2x1xf32> to vector<2x1xf32>
    %284 = vector.broadcast %283 : vector<2x1xf32> to vector<2x128xf32>
    %285 = arith.select %282, %284, %240 : vector<2x128xi1>, vector<2x128xf32>
    %286 = vector.extract_strided_slice %9 {offsets = [12, 0], sizes = [2, 128], strides = [1, 1]} : vector<16x128xf32> to vector<2x128xf32>
    %cst_37 = arith.constant dense<0.000000e+00> : vector<2x128xf32>
    %287 = tpu.matmul %258, %1, %cst_37 {dimension_numbers = #tpu.dot_dimension_numbers<[1], [0], [0], [1], [0, 0, 1, 1], [], []>} : vector<2x32xf32>, vector<32x128xf32>, vector<2x128xf32> -> vector<2x128xf32>
    %288 = arith.addf %286, %287 : vector<2x128xf32>
    %289 = arith.negf %288 : vector<2x128xf32>
    %290 = math.exp %289 : vector<2x128xf32>
    %cst_38 = arith.constant 1.000000e+00 : f32
    %291 = vector.broadcast %cst_38 : f32 to vector<2x128xf32>
    %292 = arith.addf %291, %290 : vector<2x128xf32>
    %293 = arith.divf %291, %292 : vector<2x128xf32>
    %294 = vector.extract_strided_slice %293 {offsets = [0, 32], sizes = [2, 32], strides = [1, 1]} : vector<2x128xf32> to vector<2x32xf32>
    %295 = arith.mulf %294, %255 : vector<2x32xf32>
    %296 = vector.extract_strided_slice %293 {offsets = [0, 0], sizes = [2, 32], strides = [1, 1]} : vector<2x128xf32> to vector<2x32xf32>
    %297 = vector.extract_strided_slice %288 {offsets = [0, 64], sizes = [2, 32], strides = [1, 1]} : vector<2x128xf32> to vector<2x32xf32>
    %298 = math.tanh %297 : vector<2x32xf32>
    %299 = arith.mulf %296, %298 : vector<2x32xf32>
    %300 = arith.addf %295, %299 : vector<2x32xf32>
    %301 = vector.extract_strided_slice %293 {offsets = [0, 96], sizes = [2, 32], strides = [1, 1]} : vector<2x128xf32> to vector<2x32xf32>
    %302 = math.tanh %300 : vector<2x32xf32>
    %303 = arith.mulf %301, %302 : vector<2x32xf32>
    %cst_39 = arith.constant dense<0.000000e+00> : vector<2x4xf32>
    %304 = tpu.matmul %303, %3, %cst_39 {dimension_numbers = #tpu.dot_dimension_numbers<[1], [0], [0], [1], [0, 0, 1, 1], [], []>} : vector<2x32xf32>, vector<32x4xf32>, vector<2x4xf32> -> vector<2x4xf32>
    %305 = vector.broadcast %5 : vector<1x4xf32> to vector<2x4xf32>
    %306 = arith.addf %304, %305 : vector<2x4xf32>
    %307 = vector.broadcast %280 : vector<2x1xf32> to vector<2x4xf32>
    %308 = vector.broadcast %4 : vector<1x4xf32> to vector<2x4xf32>
    %309 = arith.mulf %307, %308 : vector<2x4xf32>
    %310 = arith.addf %306, %309 : vector<2x4xf32>
    %311 = arith.negf %310 : vector<2x4xf32>
    %312 = math.exp %311 : vector<2x4xf32>
    %cst_40 = arith.constant 1.000000e+00 : f32
    %313 = vector.broadcast %cst_40 : f32 to vector<2x4xf32>
    %314 = arith.addf %313, %312 : vector<2x4xf32>
    %315 = arith.divf %313, %314 : vector<2x4xf32>
    %316 = vector.extract_strided_slice %315 {offsets = [0, 1], sizes = [2, 1], strides = [1, 1]} : vector<2x4xf32> to vector<2x1xf32>
    %317 = arith.mulf %316, %277 : vector<2x1xf32>
    %318 = vector.extract_strided_slice %315 {offsets = [0, 0], sizes = [2, 1], strides = [1, 1]} : vector<2x4xf32> to vector<2x1xf32>
    %319 = vector.extract_strided_slice %310 {offsets = [0, 2], sizes = [2, 1], strides = [1, 1]} : vector<2x4xf32> to vector<2x1xf32>
    %320 = math.tanh %319 : vector<2x1xf32>
    %321 = arith.mulf %318, %320 : vector<2x1xf32>
    %322 = arith.addf %317, %321 : vector<2x1xf32>
    %323 = vector.extract_strided_slice %315 {offsets = [0, 3], sizes = [2, 1], strides = [1, 1]} : vector<2x4xf32> to vector<2x1xf32>
    %324 = math.tanh %322 : vector<2x1xf32>
    %325 = arith.mulf %323, %324 : vector<2x1xf32>
    %c6_i32 = arith.constant 6 : i32
    %326 = vector.broadcast %c6_i32 : i32 to vector<2x128xi32>
    %327 = arith.cmpi eq, %10, %326 : vector<2x128xi32>
    %328 = vector.shape_cast %325 : vector<2x1xf32> to vector<2x1xf32>
    %329 = vector.broadcast %328 : vector<2x1xf32> to vector<2x128xf32>
    %330 = arith.select %327, %329, %285 : vector<2x128xi1>, vector<2x128xf32>
    %331 = vector.extract_strided_slice %9 {offsets = [14, 0], sizes = [2, 128], strides = [1, 1]} : vector<16x128xf32> to vector<2x128xf32>
    %cst_41 = arith.constant dense<0.000000e+00> : vector<2x128xf32>
    %332 = tpu.matmul %303, %1, %cst_41 {dimension_numbers = #tpu.dot_dimension_numbers<[1], [0], [0], [1], [0, 0, 1, 1], [], []>} : vector<2x32xf32>, vector<32x128xf32>, vector<2x128xf32> -> vector<2x128xf32>
    %333 = arith.addf %331, %332 : vector<2x128xf32>
    %334 = arith.negf %333 : vector<2x128xf32>
    %335 = math.exp %334 : vector<2x128xf32>
    %cst_42 = arith.constant 1.000000e+00 : f32
    %336 = vector.broadcast %cst_42 : f32 to vector<2x128xf32>
    %337 = arith.addf %336, %335 : vector<2x128xf32>
    %338 = arith.divf %336, %337 : vector<2x128xf32>
    %339 = vector.extract_strided_slice %338 {offsets = [0, 32], sizes = [2, 32], strides = [1, 1]} : vector<2x128xf32> to vector<2x32xf32>
    %340 = arith.mulf %339, %300 : vector<2x32xf32>
    %341 = vector.extract_strided_slice %338 {offsets = [0, 0], sizes = [2, 32], strides = [1, 1]} : vector<2x128xf32> to vector<2x32xf32>
    %342 = vector.extract_strided_slice %333 {offsets = [0, 64], sizes = [2, 32], strides = [1, 1]} : vector<2x128xf32> to vector<2x32xf32>
    %343 = math.tanh %342 : vector<2x32xf32>
    %344 = arith.mulf %341, %343 : vector<2x32xf32>
    %345 = arith.addf %340, %344 : vector<2x32xf32>
    %346 = vector.extract_strided_slice %338 {offsets = [0, 96], sizes = [2, 32], strides = [1, 1]} : vector<2x128xf32> to vector<2x32xf32>
    %347 = math.tanh %345 : vector<2x32xf32>
    %348 = arith.mulf %346, %347 : vector<2x32xf32>
    %cst_43 = arith.constant dense<0.000000e+00> : vector<2x4xf32>
    %349 = tpu.matmul %348, %3, %cst_43 {dimension_numbers = #tpu.dot_dimension_numbers<[1], [0], [0], [1], [0, 0, 1, 1], [], []>} : vector<2x32xf32>, vector<32x4xf32>, vector<2x4xf32> -> vector<2x4xf32>
    %350 = vector.broadcast %5 : vector<1x4xf32> to vector<2x4xf32>
    %351 = arith.addf %349, %350 : vector<2x4xf32>
    %352 = vector.broadcast %325 : vector<2x1xf32> to vector<2x4xf32>
    %353 = vector.broadcast %4 : vector<1x4xf32> to vector<2x4xf32>
    %354 = arith.mulf %352, %353 : vector<2x4xf32>
    %355 = arith.addf %351, %354 : vector<2x4xf32>
    %356 = arith.negf %355 : vector<2x4xf32>
    %357 = math.exp %356 : vector<2x4xf32>
    %cst_44 = arith.constant 1.000000e+00 : f32
    %358 = vector.broadcast %cst_44 : f32 to vector<2x4xf32>
    %359 = arith.addf %358, %357 : vector<2x4xf32>
    %360 = arith.divf %358, %359 : vector<2x4xf32>
    %361 = vector.extract_strided_slice %360 {offsets = [0, 1], sizes = [2, 1], strides = [1, 1]} : vector<2x4xf32> to vector<2x1xf32>
    %362 = arith.mulf %361, %322 : vector<2x1xf32>
    %363 = vector.extract_strided_slice %360 {offsets = [0, 0], sizes = [2, 1], strides = [1, 1]} : vector<2x4xf32> to vector<2x1xf32>
    %364 = vector.extract_strided_slice %355 {offsets = [0, 2], sizes = [2, 1], strides = [1, 1]} : vector<2x4xf32> to vector<2x1xf32>
    %365 = math.tanh %364 : vector<2x1xf32>
    %366 = arith.mulf %363, %365 : vector<2x1xf32>
    %367 = arith.addf %362, %366 : vector<2x1xf32>
    %368 = vector.extract_strided_slice %360 {offsets = [0, 3], sizes = [2, 1], strides = [1, 1]} : vector<2x4xf32> to vector<2x1xf32>
    %369 = math.tanh %367 : vector<2x1xf32>
    %370 = arith.mulf %368, %369 : vector<2x1xf32>
    %c7_i32 = arith.constant 7 : i32
    %371 = vector.broadcast %c7_i32 : i32 to vector<2x128xi32>
    %372 = arith.cmpi eq, %10, %371 : vector<2x128xi32>
    %373 = vector.shape_cast %370 : vector<2x1xf32> to vector<2x1xf32>
    %374 = vector.broadcast %373 : vector<2x1xf32> to vector<2x128xf32>
    %375 = arith.select %372, %374, %330 : vector<2x128xi1>, vector<2x128xf32>
    %c0_45 = arith.constant 0 : index
    %c0_46 = arith.constant 0 : index
    %376 = vector.load %arg2[%c0_45, %c0_46] : memref<2x128xf32, #tpu.memory_space<vmem>>, vector<2x128xf32>
    tpu.vector_store %arg2[%c0_45, %c0_46], %375 {strides = array<i32>} : memref<2x128xf32, #tpu.memory_space<vmem>>, vector<2x128xf32>,
    %c0_47 = arith.constant 0 : index
    %c8_48 = arith.constant 8 : index
    %377 = vector.load %arg2[%c0_47, %c8_48] : memref<2x128xf32, #tpu.memory_space<vmem>>, vector<2x32xf32>
    tpu.vector_store %arg2[%c0_47, %c8_48], %348 {strides = array<i32>} : memref<2x128xf32, #tpu.memory_space<vmem>>, vector<2x32xf32>,
    %c0_49 = arith.constant 0 : index
    %c40_50 = arith.constant 40 : index
    %378 = vector.load %arg2[%c0_49, %c40_50] : memref<2x128xf32, #tpu.memory_space<vmem>>, vector<2x32xf32>
    tpu.vector_store %arg2[%c0_49, %c40_50], %345 {strides = array<i32>} : memref<2x128xf32, #tpu.memory_space<vmem>>, vector<2x32xf32>,
    %c0_51 = arith.constant 0 : index
    %c72 = arith.constant 72 : index
    %379 = vector.load %arg2[%c0_51, %c72] : memref<2x128xf32, #tpu.memory_space<vmem>>, vector<2x1xf32>
    tpu.vector_store %arg2[%c0_51, %c72], %370 {strides = array<i32>} : memref<2x128xf32, #tpu.memory_space<vmem>>, vector<2x1xf32>,
    %c0_52 = arith.constant 0 : index
    %c73 = arith.constant 73 : index
    %380 = vector.load %arg2[%c0_52, %c73] : memref<2x128xf32, #tpu.memory_space<vmem>>, vector<2x1xf32>
    tpu.vector_store %arg2[%c0_52, %c73], %367 {strides = array<i32>} : memref<2x128xf32, #tpu.memory_space<vmem>>, vector<2x1xf32>,
    return
  }
}

</mosaic_0001>

<llo_original>
// kernel: lstm_forward.1
$region0: #{lstm_forward.1}
  #allocation0 [shape = 'u32[]', space=smem, size = 0x4, offset = 0x4, fixed_abs, tag = 'smem constant byte address 0x4 - core index']
  #allocation1 [shape = 'u32[72,128]{1,0:T(1,128)}', space=vmem, size = 0x9000, scoped, tag = 'internal scratch']
  %s0 = inlined_call_operand.vmem [shape: f32[16,4], index: 0, kind: input, shape index: {}]
  %s1 = inlined_call_operand.hbm [shape: f32[88,128], index: 1, kind: input, shape index: {}]
  %s2 = inlined_call_operand.vmem [shape: f32[2,128], index: 2, kind: output, shape index: {}]
  %s3 = sld [smem:[#allocation0]]
  $region22: #{lstm_forward.1} parent=0
    _
  %s5 = ssub.s32 1, %s3
  %s6 = scalar_select 0, %s5, %s3
  $region1: #{lstm_forward.1} parent=0
    #allocation2 [shape = 'u8[45056]{0}', space=vmem, size = 0xb000, scoped, tag = 'input window, operand 1, single buffered']
    #allocation3 [shape = 's32[1]{0}', space=sflag, size = 0x4, scoped, tag = 'scoped memory for lstm_forward.1']
    %7 = vsyncpa [#allocation3], 0
    // Predicated region
    $region2: #{lstm_forward.1} parent=1 // pred_check
      _
    $region3: #{lstm_forward.1} parent=1 // pred_check_branch
      %9 = sbr.rel (0) target = $region5
    $region4: #{lstm_forward.1} parent=1 // pred_region
      _
    $region5: #{lstm_forward.1} parent=1 // pred_fallthru
      _
    // Predicated region
    $region6: #{lstm_forward.1} parent=1 // pred_check
      _
    $region7: #{lstm_forward.1} parent=1 // pred_check_branch
      %11 = sbr.rel (0) target = $region9
    $region8: #{lstm_forward.1} parent=1 // pred_region
      %13 = vsyncadd [#allocation3], 0
      %s14 = sshll.u32 %s1, 4
      %s15 = int_to_ptr.hbm [resolvable:$true] %s14
      %s16 = sshll.u32 [#allocation2], 4
      %s17 = int_to_ptr.vmem [resolvable:$true] %s16
      %22 = dma.hbm_to_vmem [thread:$0]  %s15, 1408, %s17, [#allocation3], 128, 128, 8
    $region9: #{lstm_forward.1} parent=1 // pred_fallthru
      _
    // Predicated region
    $region10: #{lstm_forward.1} parent=1 // pred_check
      _
    $region11: #{lstm_forward.1} parent=1 // pred_check_branch
      %24 = sbr.rel (0) target = $region13
    $region12: #{lstm_forward.1} parent=1 // pred_region
      %26 = dma.done [#allocation3], 1408
    $region13: #{lstm_forward.1} parent=1 // pred_fallthru
      _
    %v27 = vld [vmem:[#allocation2] sm:$0xf]
    %v28 = vld [vmem:[#allocation2 + $0x8] sm:$0xff]
    %v29 = vld [vmem:[#allocation2 + $0x10] sm:$0xff]
    %v30 = vld [vmem:[#allocation2 + $0x18] sm:$0xff]
    %v31 = vld [vmem:[#allocation2 + $0x20] sm:$0xff]
    %v32 = vld [vmem:[#allocation2 + $0x28] sm:$0x1]
    %v33 = vld [vmem:[#allocation2 + $0x30] sm:$0xff]
    %v34 = vld [vmem:[#allocation2 + $0x38] sm:$0xff]
    %v35 = vld [vmem:[#allocation2 + $0x40] sm:$0xff]
    %v36 = vld [vmem:[#allocation2 + $0x48] sm:$0xff]
    %v37 = vld [vmem:[#allocation2 + $0x50] sm:$0x1]
    %v38 = vld [vmem:[#allocation2 + $0x51] sm:$0x1]
    %v39 = vld [vmem:[%s0] sm:$0xff]
    %v40 = vld [vmem:[%s0 + $0x8] sm:$0xff]
    %v41 = vperm.slane %v32, 0
    %vm42 = vcmask 31744
    %v44 = vsel %vm42, %v39, 0
    %v47 = vsel %vm42, %v40, 0
    %vm49 = vcmask 1043456
    %v51 = vsel %vm49, %v27, 0
    %53 = vmatpush.msra.mxu0 0.0
    %54 = vmatpush.msra.mxu0 0.0
    %55 = vmatpush.msra.mxu0 0.0
    %56 = vmatpush.msra.mxu0 0.0
    %57 = vmatpush.msra.mxu0 0.0
    %58 = vmatpush.msra.mxu0 0.0
    %59 = vmatpush.msra.mxu0 0.0
    %60 = vmatpush.msra.mxu0 0.0
    %61 = vmatpush.msra.mxu0 0.0
    %62 = vmatpush.msra.mxu0 0.0
    %63 = vmatpush.msra.mxu0 0.0
    %64 = vmatpush.msra.mxu0 0.0
    %65 = vmatpush.msra.mxu0 0.0
    %66 = vmatpush.msra.mxu0 0.0
    %67 = vmatpush.msra.mxu0 0.0
    %68 = vmatpush.msra.mxu0 %v51
    %69 = vmatmul.f32.gmra.mxu0 %v44
    %v70 = vpop.f32.mrf.mxu0
    %v71 = vadd.f32 %v41, %v70
    %72 = vmatmul.f32.gmra.mxu0 %v47
    %v73 = vpop.f32.mrf.mxu0
    %v74 = vadd.f32 %v41, %v73
    %75 = vdwg.mxu0
    %v76 = vlaneseq
    %v77 = vand.u32 %v76, 127
    %vm78 = vcmask 261120
    %v80 = vsel %vm78, 0.0, 0
    %82 = vmatpush.msra.mxu0 0.0
    %83 = vmatpush.msra.mxu0 0.0
    %84 = vmatpush.msra.mxu0 0.0
    %85 = vmatpush.msra.mxu0 0.0
    %86 = vmatpush.msra.mxu0 0.0
    %87 = vmatpush.msra.mxu0 0.0
    %88 = vmatpush.msra.mxu0 0.0
    %89 = vmatpush.msra.mxu0 0.0
    %90 = vmatpush.msra.mxu0 0.0
    %91 = vmatpush.msra.mxu0 0.0
    %92 = vmatpush.msra.mxu0 0.0
    %93 = vmatpush.msra.mxu0 0.0
    %94 = vmatpush.msra.mxu0 %v31
    %95 = vmatpush.msra.mxu0 %v30
    %96 = vmatpush.msra.mxu0 %v29
    %97 = vmatpush.msra.mxu0 %v28
    %98 = vmatmul.f32.gmra.mxu0 %v80
    %v99 = vpop.f32.mrf.mxu0
    %v100 = vadd.f32 0.0, %v99
    %101 = vdwg.mxu0
    %v102 = vadd.f32 %v71, %v100
    %v103 = vxor.u32 %v102, 2147483648
    %v104 = vmul.f32 %v103, 1.442695
    %v105 = vpow.pop %v104
    %v106 = vadd.f32 %v105, 1.0
    %v107 = vrcp.pop %v106
    %v108 = vmul.f32 %v106, %v107
    %v109 = vsub.f32 1.0, %v108
    %v110 = vmul.f32 %v107, %v109
    %v111 = vadd.f32 %v107, %v110
    %vm112 = vweird.f32 %v106
    %vm113 = vweird.f32 %v107
    %vm114 = vmor %vm112, %vm113
    %v115 = vsel %vm114, %v107, %v111
    %v116 = vand.u32 2147483647, %v106
    %vm117 = vcmp.eq.f32.partialorder %v116, 8.507059e+37
    %v118 = vand.u32 %v106, 2147483648
    %v119 = vor.u32 1.1754944e-38, %v118
    %v120 = vsel %vm117, %v119, %v115
    %v121 = vmul.f32 1.0, %v120
    %v122 = vmul.f32 %v121, 0.0
    %v123 = vtanh.pop %v102
    %125 = vrot.lane.b32.xlu0 %v123, 64
    %v126 = vpop.permute.xlu0 %125
    %v128 = vmul.f32 %v121, %v126
    %130 = vrot.lane.b32.xlu0 %v128, 32
    %v131 = vpop.permute.xlu0 %130
    %v133 = vadd.f32 %v122, %v131
    %v134 = vtanh.pop %v133
    %136 = vrot.lane.b32.xlu0 %v134, 64
    %v137 = vpop.permute.xlu0 %136
    %v139 = vmul.f32 %v121, %v137
    %v140 = vperm.slane %v38, 0
    %142 = vrot.lane.b32.xlu0 %v139, 32
    %v143 = vpop.permute.xlu0 %142
    %v144 = vsel %vm78, %v143, 0
    %146 = vmatpush.msra.mxu0 0.0
    %147 = vmatpush.msra.mxu0 0.0
    %148 = vmatpush.msra.mxu0 0.0
    %149 = vmatpush.msra.mxu0 0.0
    %150 = vmatpush.msra.mxu0 0.0
    %151 = vmatpush.msra.mxu0 0.0
    %152 = vmatpush.msra.mxu0 0.0
    %153 = vmatpush.msra.mxu0 0.0
    %154 = vmatpush.msra.mxu0 0.0
    %155 = vmatpush.msra.mxu0 0.0
    %156 = vmatpush.msra.mxu0 0.0
    %157 = vmatpush.msra.mxu0 0.0
    %158 = vmatpush.msra.mxu0 %v36
    %159 = vmatpush.msra.mxu0 %v35
    %160 = vmatpush.msra.mxu0 %v34
    %161 = vmatpush.msra.mxu0 %v33
    %162 = vmatmul.f32.gmra.mxu0 %v144
    %v163 = vpop.f32.mrf.mxu0
    %v164 = vadd.f32 %v140, %v163
    %165 = vdwg.mxu0
    %v166 = vperm.slane %v37, 0
    %v167 = vmul.f32 %v166, 0.0
    %v168 = vadd.f32 %v164, %v167
    %v169 = vxor.u32 %v168, 2147483648
    %v170 = vmul.f32 %v169, 1.442695
    %v171 = vpow.pop %v170
    %v172 = vadd.f32 %v171, 1.0
    %v173 = vrcp.pop %v172
    %v174 = vmul.f32 %v172, %v173
    %v175 = vsub.f32 1.0, %v174
    %v176 = vmul.f32 %v173, %v175
    %v177 = vadd.f32 %v173, %v176
    %vm178 = vweird.f32 %v172
    %vm179 = vweird.f32 %v173
    %vm180 = vmor %vm178, %vm179
    %v181 = vsel %vm180, %v173, %v177
    %v182 = vand.u32 2147483647, %v172
    %vm183 = vcmp.eq.f32.partialorder %v182, 8.507059e+37
    %v184 = vand.u32 %v172, 2147483648
    %v185 = vor.u32 1.1754944e-38, %v184
    %v186 = vsel %vm183, %v185, %v181
    %v187 = vmul.f32 1.0, %v186
    %v188 = vmul.f32 %v187, 0.0
    %v189 = vtanh.pop %v168
    %191 = vrot.lane.b32.xlu0 %v189, 126
    %v192 = vpop.permute.xlu0 %191
    %v194 = vmul.f32 %v187, %v192
    %196 = vrot.lane.b32.xlu0 %v194, 1
    %v197 = vpop.permute.xlu0 %196
    %v199 = vadd.f32 %v188, %v197
    %v200 = vtanh.pop %v199
    %202 = vrot.lane.b32.xlu0 %v200, 2
    %v203 = vpop.permute.xlu0 %202
    %v205 = vmul.f32 %v187, %v203
    %vm206 = vcmp.eq.s32.totalorder %v77, 0
    %208 = vset.pattern.permute.xlu0 3
    %209 = vperm.xlu0 %208, %v205
    %v210 = vpop.permute.xlu0 %209
    %v212 = vsel %vm206, %v210, 0.0
    %213 = vmatpush.msra.mxu0 0.0
    %214 = vmatpush.msra.mxu0 0.0
    %215 = vmatpush.msra.mxu0 0.0
    %216 = vmatpush.msra.mxu0 0.0
    %217 = vmatpush.msra.mxu0 0.0
    %218 = vmatpush.msra.mxu0 0.0
    %219 = vmatpush.msra.mxu0 0.0
    %220 = vmatpush.msra.mxu0 0.0
    %221 = vmatpush.msra.mxu0 0.0
    %222 = vmatpush.msra.mxu0 0.0
    %223 = vmatpush.msra.mxu0 0.0
    %224 = vmatpush.msra.mxu0 0.0
    %225 = vmatpush.msra.mxu0 %v31
    %226 = vmatpush.msra.mxu0 %v30
    %227 = vmatpush.msra.mxu0 %v29
    %228 = vmatpush.msra.mxu0 %v28
    %229 = vmatmul.f32.gmra.mxu0 %v144
    %v230 = vpop.f32.mrf.mxu0
    %v231 = vadd.f32 0.0, %v230
    %232 = vdwg.mxu0
    %v234 = vrot.slane %v231, 6
    %v236 = vadd.f32 %v71, %v234
    %v237 = vxor.u32 %v236, 2147483648
    %v238 = vmul.f32 %v237, 1.442695
    %v239 = vpow.pop %v238
    %v240 = vadd.f32 %v239, 1.0
    %v241 = vrcp.pop %v240
    %v242 = vmul.f32 %v240, %v241
    %v243 = vsub.f32 1.0, %v242
    %v244 = vmul.f32 %v241, %v243
    %v245 = vadd.f32 %v241, %v244
    %vm246 = vweird.f32 %v240
    %vm247 = vweird.f32 %v241
    %vm248 = vmor %vm246, %vm247
    %v249 = vsel %vm248, %v241, %v245
    %v250 = vand.u32 2147483647, %v240
    %vm251 = vcmp.eq.f32.partialorder %v250, 8.507059e+37
    %v252 = vand.u32 %v240, 2147483648
    %v253 = vor.u32 1.1754944e-38, %v252
    %v254 = vsel %vm251, %v253, %v249
    %v255 = vmul.f32 1.0, %v254
    %v257 = vrot.slane %v133, 6
    %v259 = vmul.f32 %v255, %v257
    %v260 = vtanh.pop %v236
    %262 = vrot.lane.b32.xlu0 %v260, 64
    %v263 = vpop.permute.xlu0 %262
    %v265 = vmul.f32 %v255, %v263
    %267 = vrot.lane.b32.xlu0 %v265, 32
    %v268 = vpop.permute.xlu0 %267
    %v270 = vadd.f32 %v259, %v268
    %v271 = vtanh.pop %v270
    %273 = vrot.lane.b32.xlu0 %v271, 64
    %v274 = vpop.permute.xlu0 %273
    %v276 = vmul.f32 %v255, %v274
    %v278 = vrot.slane %v276, 2
    %279 = vrot.lane.b32.xlu0 %v278, 32
    %v280 = vpop.permute.xlu0 %279
    %v281 = vsel %vm78, %v280, 0
    %283 = vmatpush.msra.mxu0 0.0
    %284 = vmatpush.msra.mxu0 0.0
    %285 = vmatpush.msra.mxu0 0.0
    %286 = vmatpush.msra.mxu0 0.0
    %287 = vmatpush.msra.mxu0 0.0
    %288 = vmatpush.msra.mxu0 0.0
    %289 = vmatpush.msra.mxu0 0.0
    %290 = vmatpush.msra.mxu0 0.0
    %291 = vmatpush.msra.mxu0 0.0
    %292 = vmatpush.msra.mxu0 0.0
    %293 = vmatpush.msra.mxu0 0.0
    %294 = vmatpush.msra.mxu0 0.0
    %295 = vmatpush.msra.mxu0 %v36
    %296 = vmatpush.msra.mxu0 %v35
    %297 = vmatpush.msra.mxu0 %v34
    %298 = vmatpush.msra.mxu0 %v33
    %299 = vmatmul.f32.gmra.mxu0 %v281
    %v300 = vpop.f32.mrf.mxu0
    %v301 = vadd.f32 %v140, %v300
    %302 = vdwg.mxu0
    %v303 = vmul.f32 %v210, %v166
    %v304 = vadd.f32 %v301, %v303
    %v305 = vxor.u32 %v304, 2147483648
    %v306 = vmul.f32 %v305, 1.442695
    %v307 = vpow.pop %v306
    %v308 = vadd.f32 %v307, 1.0
    %v309 = vrcp.pop %v308
    %v310 = vmul.f32 %v308, %v309
    %v311 = vsub.f32 1.0, %v310
    %v312 = vmul.f32 %v309, %v311
    %v313 = vadd.f32 %v309, %v312
    %vm314 = vweird.f32 %v308
    %vm315 = vweird.f32 %v309
    %vm316 = vmor %vm314, %vm315
    %v317 = vsel %vm316, %v309, %v313
    %v318 = vand.u32 2147483647, %v308
    %vm319 = vcmp.eq.f32.partialorder %v318, 8.507059e+37
    %v320 = vand.u32 %v308, 2147483648
    %v321 = vor.u32 1.1754944e-38, %v320
    %v322 = vsel %vm319, %v321, %v317
    %v323 = vmul.f32 1.0, %v322
    %v324 = vmul.f32 %v323, %v199
    %v325 = vtanh.pop %v304
    %327 = vrot.lane.b32.xlu0 %v325, 126
    %v328 = vpop.permute.xlu0 %327
    %v330 = vmul.f32 %v323, %v328
    %332 = vrot.lane.b32.xlu0 %v330, 1
    %v333 = vpop.permute.xlu0 %332
    %v335 = vadd.f32 %v324, %v333
    %v336 = vtanh.pop %v335
    %338 = vrot.lane.b32.xlu0 %v336, 2
    %v339 = vpop.permute.xlu0 %338
    %v341 = vmul.f32 %v323, %v339
    %vm342 = vcmp.eq.s32.totalorder %v77, 1
    %344 = vset.pattern.permute.xlu0 3
    %345 = vperm.xlu0 %344, %v341
    %v346 = vpop.permute.xlu0 %345
    %v348 = vsel %vm342, %v346, %v212
    %349 = vmatpush.msra.mxu0 0.0
    %350 = vmatpush.msra.mxu0 0.0
    %351 = vmatpush.msra.mxu0 0.0
    %352 = vmatpush.msra.mxu0 0.0
    %353 = vmatpush.msra.mxu0 0.0
    %354 = vmatpush.msra.mxu0 0.0
    %355 = vmatpush.msra.mxu0 0.0
    %356 = vmatpush.msra.mxu0 0.0
    %357 = vmatpush.msra.mxu0 0.0
    %358 = vmatpush.msra.mxu0 0.0
    %359 = vmatpush.msra.mxu0 0.0
    %360 = vmatpush.msra.mxu0 0.0
    %361 = vmatpush.msra.mxu0 %v31
    %362 = vmatpush.msra.mxu0 %v30
    %363 = vmatpush.msra.mxu0 %v29
    %364 = vmatpush.msra.mxu0 %v28
    %365 = vmatmul.f32.gmra.mxu0 %v281
    %v366 = vpop.f32.mrf.mxu0
    %v367 = vadd.f32 0.0, %v366
    %368 = vdwg.mxu0
    %v370 = vrot.slane %v367, 4
    %v372 = vadd.f32 %v71, %v370
    %v373 = vxor.u32 %v372, 2147483648
    %v374 = vmul.f32 %v373, 1.442695
    %v375 = vpow.pop %v374
    %v376 = vadd.f32 %v375, 1.0
    %v377 = vrcp.pop %v376
    %v378 = vmul.f32 %v376, %v377
    %v379 = vsub.f32 1.0, %v378
    %v380 = vmul.f32 %v377, %v379
    %v381 = vadd.f32 %v377, %v380
    %vm382 = vweird.f32 %v376
    %vm383 = vweird.f32 %v377
    %vm384 = vmor %vm382, %vm383
    %v385 = vsel %vm384, %v377, %v381
    %v386 = vand.u32 2147483647, %v376
    %vm387 = vcmp.eq.f32.partialorder %v386, 8.507059e+37
    %v388 = vand.u32 %v376, 2147483648
    %v389 = vor.u32 1.1754944e-38, %v388
    %v390 = vsel %vm387, %v389, %v385
    %v391 = vmul.f32 1.0, %v390
    %v393 = vrot.slane %v270, 6
    %v395 = vmul.f32 %v391, %v393
    %v396 = vtanh.pop %v372
    %398 = vrot.lane.b32.xlu0 %v396, 64
    %v399 = vpop.permute.xlu0 %398
    %v401 = vmul.f32 %v391, %v399
    %403 = vrot.lane.b32.xlu0 %v401, 32
    %v404 = vpop.permute.xlu0 %403
    %v406 = vadd.f32 %v395, %v404
    %v407 = vtanh.pop %v406
    %409 = vrot.lane.b32.xlu0 %v407, 64
    %v410 = vpop.permute.xlu0 %409
    %v412 = vmul.f32 %v391, %v410
    %v414 = vrot.slane %v412, 4
    %415 = vrot.lane.b32.xlu0 %v414, 32
    %v416 = vpop.permute.xlu0 %415
    %v417 = vsel %vm78, %v416, 0
    %419 = vmatpush.msra.mxu0 0.0
    %420 = vmatpush.msra.mxu0 0.0
    %421 = vmatpush.msra.mxu0 0.0
    %422 = vmatpush.msra.mxu0 0.0
    %423 = vmatpush.msra.mxu0 0.0
    %424 = vmatpush.msra.mxu0 0.0
    %425 = vmatpush.msra.mxu0 0.0
    %426 = vmatpush.msra.mxu0 0.0
    %427 = vmatpush.msra.mxu0 0.0
    %428 = vmatpush.msra.mxu0 0.0
    %429 = vmatpush.msra.mxu0 0.0
    %430 = vmatpush.msra.mxu0 0.0
    %431 = vmatpush.msra.mxu0 %v36
    %432 = vmatpush.msra.mxu0 %v35
    %433 = vmatpush.msra.mxu0 %v34
    %434 = vmatpush.msra.mxu0 %v33
    %435 = vmatmul.f32.gmra.mxu0 %v417
    %v436 = vpop.f32.mrf.mxu0
    %v437 = vadd.f32 %v140, %v436
    %438 = vdwg.mxu0
    %v439 = vmul.f32 %v346, %v166
    %v440 = vadd.f32 %v437, %v439
    %v441 = vxor.u32 %v440, 2147483648
    %v442 = vmul.f32 %v441, 1.442695
    %v443 = vpow.pop %v442
    %v444 = vadd.f32 %v443, 1.0
    %v445 = vrcp.pop %v444
    %v446 = vmul.f32 %v444, %v445
    %v447 = vsub.f32 1.0, %v446
    %v448 = vmul.f32 %v445, %v447
    %v449 = vadd.f32 %v445, %v448
    %vm450 = vweird.f32 %v444
    %vm451 = vweird.f32 %v445
    %vm452 = vmor %vm450, %vm451
    %v453 = vsel %vm452, %v445, %v449
    %v454 = vand.u32 2147483647, %v444
    %vm455 = vcmp.eq.f32.partialorder %v454, 8.507059e+37
    %v456 = vand.u32 %v444, 2147483648
    %v457 = vor.u32 1.1754944e-38, %v456
    %v458 = vsel %vm455, %v457, %v453
    %v459 = vmul.f32 1.0, %v458
    %v460 = vmul.f32 %v459, %v335
    %v461 = vtanh.pop %v440
    %463 = vrot.lane.b32.xlu0 %v461, 126
    %v464 = vpop.permute.xlu0 %463
    %v466 = vmul.f32 %v459, %v464
    %468 = vrot.lane.b32.xlu0 %v466, 1
    %v469 = vpop.permute.xlu0 %468
    %v471 = vadd.f32 %v460, %v469
    %v472 = vtanh.pop %v471
    %474 = vrot.lane.b32.xlu0 %v472, 2
    %v475 = vpop.permute.xlu0 %474
    %v477 = vmul.f32 %v459, %v475
    %vm478 = vcmp.eq.s32.totalorder %v77, 2
    %480 = vset.pattern.permute.xlu0 3
    %481 = vperm.xlu0 %480, %v477
    %v482 = vpop.permute.xlu0 %481
    %v484 = vsel %vm478, %v482, %v348
    %485 = vmatpush.msra.mxu0 0.0
    %486 = vmatpush.msra.mxu0 0.0
    %487 = vmatpush.msra.mxu0 0.0
    %488 = vmatpush.msra.mxu0 0.0
    %489 = vmatpush.msra.mxu0 0.0
    %490 = vmatpush.msra.mxu0 0.0
    %491 = vmatpush.msra.mxu0 0.0
    %492 = vmatpush.msra.mxu0 0.0
    %493 = vmatpush.msra.mxu0 0.0
    %494 = vmatpush.msra.mxu0 0.0
    %495 = vmatpush.msra.mxu0 0.0
    %496 = vmatpush.msra.mxu0 0.0
    %497 = vmatpush.msra.mxu0 %v31
    %498 = vmatpush.msra.mxu0 %v30
    %499 = vmatpush.msra.mxu0 %v29
    %500 = vmatpush.msra.mxu0 %v28
    %501 = vmatmul.f32.gmra.mxu0 %v417
    %v502 = vpop.f32.mrf.mxu0
    %v503 = vadd.f32 0.0, %v502
    %504 = vdwg.mxu0
    %v506 = vrot.slane %v503, 2
    %v508 = vadd.f32 %v71, %v506
    %v509 = vxor.u32 %v508, 2147483648
    %v510 = vmul.f32 %v509, 1.442695
    %v511 = vpow.pop %v510
    %v512 = vadd.f32 %v511, 1.0
    %v513 = vrcp.pop %v512
    %v514 = vmul.f32 %v512, %v513
    %v515 = vsub.f32 1.0, %v514
    %v516 = vmul.f32 %v513, %v515
    %v517 = vadd.f32 %v513, %v516
    %vm518 = vweird.f32 %v512
    %vm519 = vweird.f32 %v513
    %vm520 = vmor %vm518, %vm519
    %v521 = vsel %vm520, %v513, %v517
    %v522 = vand.u32 2147483647, %v512
    %vm523 = vcmp.eq.f32.partialorder %v522, 8.507059e+37
    %v524 = vand.u32 %v512, 2147483648
    %v525 = vor.u32 1.1754944e-38, %v524
    %v526 = vsel %vm523, %v525, %v521
    %v527 = vmul.f32 1.0, %v526
    %v529 = vrot.slane %v406, 6
    %v531 = vmul.f32 %v527, %v529
    %v532 = vtanh.pop %v508
    %534 = vrot.lane.b32.xlu0 %v532, 64
    %v535 = vpop.permute.xlu0 %534
    %v537 = vmul.f32 %v527, %v535
    %539 = vrot.lane.b32.xlu0 %v537, 32
    %v540 = vpop.permute.xlu0 %539
    %v542 = vadd.f32 %v531, %v540
    %v543 = vtanh.pop %v542
    %545 = vrot.lane.b32.xlu0 %v543, 64
    %v546 = vpop.permute.xlu0 %545
    %v548 = vmul.f32 %v527, %v546
    %v550 = vrot.slane %v548, 6
    %551 = vrot.lane.b32.xlu0 %v550, 32
    %v552 = vpop.permute.xlu0 %551
    %v553 = vsel %vm78, %v552, 0
    %555 = vmatpush.msra.mxu0 0.0
    %556 = vmatpush.msra.mxu0 0.0
    %557 = vmatpush.msra.mxu0 0.0
    %558 = vmatpush.msra.mxu0 0.0
    %559 = vmatpush.msra.mxu0 0.0
    %560 = vmatpush.msra.mxu0 0.0
    %561 = vmatpush.msra.mxu0 0.0
    %562 = vmatpush.msra.mxu0 0.0
    %563 = vmatpush.msra.mxu0 0.0
    %564 = vmatpush.msra.mxu0 0.0
    %565 = vmatpush.msra.mxu0 0.0
    %566 = vmatpush.msra.mxu0 0.0
    %567 = vmatpush.msra.mxu0 %v36
    %568 = vmatpush.msra.mxu0 %v35
    %569 = vmatpush.msra.mxu0 %v34
    %570 = vmatpush.msra.mxu0 %v33
    %571 = vmatmul.f32.gmra.mxu0 %v553
    %v572 = vpop.f32.mrf.mxu0
    %v573 = vadd.f32 %v140, %v572
    %574 = vdwg.mxu0
    %v575 = vmul.f32 %v482, %v166
    %v576 = vadd.f32 %v573, %v575
    %v577 = vxor.u32 %v576, 2147483648
    %v578 = vmul.f32 %v577, 1.442695
    %v579 = vpow.pop %v578
    %v580 = vadd.f32 %v579, 1.0
    %v581 = vrcp.pop %v580
    %v582 = vmul.f32 %v580, %v581
    %v583 = vsub.f32 1.0, %v582
    %v584 = vmul.f32 %v581, %v583
    %v585 = vadd.f32 %v581, %v584
    %vm586 = vweird.f32 %v580
    %vm587 = vweird.f32 %v581
    %vm588 = vmor %vm586, %vm587
    %v589 = vsel %vm588, %v581, %v585
    %v590 = vand.u32 2147483647, %v580
    %vm591 = vcmp.eq.f32.partialorder %v590, 8.507059e+37
    %v592 = vand.u32 %v580, 2147483648
    %v593 = vor.u32 1.1754944e-38, %v592
    %v594 = vsel %vm591, %v593, %v589
    %v595 = vmul.f32 1.0, %v594
    %v596 = vmul.f32 %v595, %v471
    %v597 = vtanh.pop %v576
    %599 = vrot.lane.b32.xlu0 %v597, 126
    %v600 = vpop.permute.xlu0 %599
    %v602 = vmul.f32 %v595, %v600
    %604 = vrot.lane.b32.xlu0 %v602, 1
    %v605 = vpop.permute.xlu0 %604
    %v607 = vadd.f32 %v596, %v605
    %v608 = vtanh.pop %v607
    %610 = vrot.lane.b32.xlu0 %v608, 2
    %v611 = vpop.permute.xlu0 %610
    %v613 = vmul.f32 %v595, %v611
    %vm614 = vcmp.eq.s32.totalorder %v77, 3
    %616 = vset.pattern.permute.xlu0 3
    %617 = vperm.xlu0 %616, %v613
    %v618 = vpop.permute.xlu0 %617
    %v620 = vsel %vm614, %v618, %v484
    %621 = vmatpush.msra.mxu0 0.0
    %622 = vmatpush.msra.mxu0 0.0
    %623 = vmatpush.msra.mxu0 0.0
    %624 = vmatpush.msra.mxu0 0.0
    %625 = vmatpush.msra.mxu0 0.0
    %626 = vmatpush.msra.mxu0 0.0
    %627 = vmatpush.msra.mxu0 0.0
    %628 = vmatpush.msra.mxu0 0.0
    %629 = vmatpush.msra.mxu0 0.0
    %630 = vmatpush.msra.mxu0 0.0
    %631 = vmatpush.msra.mxu0 0.0
    %632 = vmatpush.msra.mxu0 0.0
    %633 = vmatpush.msra.mxu0 %v31
    %634 = vmatpush.msra.mxu0 %v30
    %635 = vmatpush.msra.mxu0 %v29
    %636 = vmatpush.msra.mxu0 %v28
    %637 = vmatmul.f32.gmra.mxu0 %v553
    %v638 = vpop.f32.mrf.mxu0
    %v639 = vadd.f32 0.0, %v638
    %640 = vdwg.mxu0
    %v641 = vadd.f32 %v74, %v639
    %v642 = vxor.u32 %v641, 2147483648
    %v643 = vmul.f32 %v642, 1.442695
    %v644 = vpow.pop %v643
    %v645 = vadd.f32 %v644, 1.0
    %v646 = vrcp.pop %v645
    %v647 = vmul.f32 %v645, %v646
    %v648 = vsub.f32 1.0, %v647
    %v649 = vmul.f32 %v646, %v648
    %v650 = vadd.f32 %v646, %v649
    %vm651 = vweird.f32 %v645
    %vm652 = vweird.f32 %v646
    %vm653 = vmor %vm651, %vm652
    %v654 = vsel %vm653, %v646, %v650
    %v655 = vand.u32 2147483647, %v645
    %vm656 = vcmp.eq.f32.partialorder %v655, 8.507059e+37
    %v657 = vand.u32 %v645, 2147483648
    %v658 = vor.u32 1.1754944e-38, %v657
    %v659 = vsel %vm656, %v658, %v654
    %v660 = vmul.f32 1.0, %v659
    %v662 = vrot.slane %v542, 6
    %v664 = vmul.f32 %v660, %v662
    %v665 = vtanh.pop %v641
    %667 = vrot.lane.b32.xlu0 %v665, 64
    %v668 = vpop.permute.xlu0 %667
    %v670 = vmul.f32 %v660, %v668
    %672 = vrot.lane.b32.xlu0 %v670, 32
    %v673 = vpop.permute.xlu0 %672
    %v675 = vadd.f32 %v664, %v673
    %v676 = vtanh.pop %v675
    %678 = vrot.lane.b32.xlu0 %v676, 64
    %v679 = vpop.permute.xlu0 %678
    %v681 = vmul.f32 %v660, %v679
    %683 = vrot.lane.b32.xlu0 %v681, 32
    %v684 = vpop.permute.xlu0 %683
    %v685 = vsel %vm78, %v684, 0
    %687 = vmatpush.msra.mxu0 0.0
    %688 = vmatpush.msra.mxu0 0.0
    %689 = vmatpush.msra.mxu0 0.0
    %690 = vmatpush.msra.mxu0 0.0
    %691 = vmatpush.msra.mxu0 0.0
    %692 = vmatpush.msra.mxu0 0.0
    %693 = vmatpush.msra.mxu0 0.0
    %694 = vmatpush.msra.mxu0 0.0
    %695 = vmatpush.msra.mxu0 0.0
    %696 = vmatpush.msra.mxu0 0.0
    %697 = vmatpush.msra.mxu0 0.0
    %698 = vmatpush.msra.mxu0 0.0
    %699 = vmatpush.msra.mxu0 %v36
    %700 = vmatpush.msra.mxu0 %v35
    %701 = vmatpush.msra.mxu0 %v34
    %702 = vmatpush.msra.mxu0 %v33
    %703 = vmatmul.f32.gmra.mxu0 %v685
    %v704 = vpop.f32.mrf.mxu0
    %v705 = vadd.f32 %v140, %v704
    %706 = vdwg.mxu0
    %v707 = vmul.f32 %v618, %v166
    %v708 = vadd.f32 %v705, %v707
    %v709 = vxor.u32 %v708, 2147483648
    %v710 = vmul.f32 %v709, 1.442695
    %v711 = vpow.pop %v710
    %v712 = vadd.f32 %v711, 1.0
    %v713 = vrcp.pop %v712
    %v714 = vmul.f32 %v712, %v713
    %v715 = vsub.f32 1.0, %v714
    %v716 = vmul.f32 %v713, %v715
    %v717 = vadd.f32 %v713, %v716
    %vm718 = vweird.f32 %v712
    %vm719 = vweird.f32 %v713
    %vm720 = vmor %vm718, %vm719
    %v721 = vsel %vm720, %v713, %v717
    %v722 = vand.u32 2147483647, %v712
    %vm723 = vcmp.eq.f32.partialorder %v722, 8.507059e+37
    %v724 = vand.u32 %v712, 2147483648
    %v725 = vor.u32 1.1754944e-38, %v724
    %v726 = vsel %vm723, %v725, %v721
    %v727 = vmul.f32 1.0, %v726
    %v728 = vmul.f32 %v727, %v607
    %v729 = vtanh.pop %v708
    %731 = vrot.lane.b32.xlu0 %v729, 126
    %v732 = vpop.permute.xlu0 %731
    %v734 = vmul.f32 %v727, %v732
    %736 = vrot.lane.b32.xlu0 %v734, 1
    %v737 = vpop.permute.xlu0 %736
    %v739 = vadd.f32 %v728, %v737
    %v740 = vtanh.pop %v739
    %742 = vrot.lane.b32.xlu0 %v740, 2
    %v743 = vpop.permute.xlu0 %742
    %v745 = vmul.f32 %v727, %v743
    %vm746 = vcmp.eq.s32.totalorder %v77, 4
    %748 = vset.pattern.permute.xlu0 3
    %749 = vperm.xlu0 %748, %v745
    %v750 = vpop.permute.xlu0 %749
    %v752 = vsel %vm746, %v750, %v620
    %753 = vmatpush.msra.mxu0 0.0
    %754 = vmatpush.msra.mxu0 0.0
    %755 = vmatpush.msra.mxu0 0.0
    %756 = vmatpush.msra.mxu0 0.0
    %757 = vmatpush.msra.mxu0 0.0
    %758 = vmatpush.msra.mxu0 0.0
    %759 = vmatpush.msra.mxu0 0.0
    %760 = vmatpush.msra.mxu0 0.0
    %761 = vmatpush.msra.mxu0 0.0
    %762 = vmatpush.msra.mxu0 0.0
    %763 = vmatpush.msra.mxu0 0.0
    %764 = vmatpush.msra.mxu0 0.0
    %765 = vmatpush.msra.mxu0 %v31
    %766 = vmatpush.msra.mxu0 %v30
    %767 = vmatpush.msra.mxu0 %v29
    %768 = vmatpush.msra.mxu0 %v28
    %769 = vmatmul.f32.gmra.mxu0 %v685
    %v770 = vpop.f32.mrf.mxu0
    %v771 = vadd.f32 0.0, %v770
    %772 = vdwg.mxu0
    %v774 = vrot.slane %v771, 6
    %v776 = vadd.f32 %v74, %v774
    %v777 = vxor.u32 %v776, 2147483648
    %v778 = vmul.f32 %v777, 1.442695
    %v779 = vpow.pop %v778
    %v780 = vadd.f32 %v779, 1.0
    %v781 = vrcp.pop %v780
    %v782 = vmul.f32 %v780, %v781
    %v783 = vsub.f32 1.0, %v782
    %v784 = vmul.f32 %v781, %v783
    %v785 = vadd.f32 %v781, %v784
    %vm786 = vweird.f32 %v780
    %vm787 = vweird.f32 %v781
    %vm788 = vmor %vm786, %vm787
    %v789 = vsel %vm788, %v781, %v785
    %v790 = vand.u32 2147483647, %v780
    %vm791 = vcmp.eq.f32.partialorder %v790, 8.507059e+37
    %v792 = vand.u32 %v780, 2147483648
    %v793 = vor.u32 1.1754944e-38, %v792
    %v794 = vsel %vm791, %v793, %v789
    %v795 = vmul.f32 1.0, %v794
    %v797 = vrot.slane %v675, 6
    %v799 = vmul.f32 %v795, %v797
    %v800 = vtanh.pop %v776
    %802 = vrot.lane.b32.xlu0 %v800, 64
    %v803 = vpop.permute.xlu0 %802
    %v805 = vmul.f32 %v795, %v803
    %807 = vrot.lane.b32.xlu0 %v805, 32
    %v808 = vpop.permute.xlu0 %807
    %v810 = vadd.f32 %v799, %v808
    %v811 = vtanh.pop %v810
    %813 = vrot.lane.b32.xlu0 %v811, 64
    %v814 = vpop.permute.xlu0 %813
    %v816 = vmul.f32 %v795, %v814
    %v818 = vrot.slane %v816, 2
    %819 = vrot.lane.b32.xlu0 %v818, 32
    %v820 = vpop.permute.xlu0 %819
    %v821 = vsel %vm78, %v820, 0
    %823 = vmatpush.msra.mxu0 0.0
    %824 = vmatpush.msra.mxu0 0.0
    %825 = vmatpush.msra.mxu0 0.0
    %826 = vmatpush.msra.mxu0 0.0
    %827 = vmatpush.msra.mxu0 0.0
    %828 = vmatpush.msra.mxu0 0.0
    %829 = vmatpush.msra.mxu0 0.0
    %830 = vmatpush.msra.mxu0 0.0
    %831 = vmatpush.msra.mxu0 0.0
    %832 = vmatpush.msra.mxu0 0.0
    %833 = vmatpush.msra.mxu0 0.0
    %834 = vmatpush.msra.mxu0 0.0
    %835 = vmatpush.msra.mxu0 %v36
    %836 = vmatpush.msra.mxu0 %v35
    %837 = vmatpush.msra.mxu0 %v34
    %838 = vmatpush.msra.mxu0 %v33
    %839 = vmatmul.f32.gmra.mxu0 %v821
    %v840 = vpop.f32.mrf.mxu0
    %v841 = vadd.f32 %v140, %v840
    %842 = vdwg.mxu0
    %v843 = vmul.f32 %v750, %v166
    %v844 = vadd.f32 %v841, %v843
    %v845 = vxor.u32 %v844, 2147483648
    %v846 = vmul.f32 %v845, 1.442695
    %v847 = vpow.pop %v846
    %v848 = vadd.f32 %v847, 1.0
    %v849 = vrcp.pop %v848
    %v850 = vmul.f32 %v848, %v849
    %v851 = vsub.f32 1.0, %v850
    %v852 = vmul.f32 %v849, %v851
    %v853 = vadd.f32 %v849, %v852
    %vm854 = vweird.f32 %v848
    %vm855 = vweird.f32 %v849
    %vm856 = vmor %vm854, %vm855
    %v857 = vsel %vm856, %v849, %v853
    %v858 = vand.u32 2147483647, %v848
    %vm859 = vcmp.eq.f32.partialorder %v858, 8.507059e+37
    %v860 = vand.u32 %v848, 2147483648
    %v861 = vor.u32 1.1754944e-38, %v860
    %v862 = vsel %vm859, %v861, %v857
    %v863 = vmul.f32 1.0, %v862
    %v864 = vmul.f32 %v863, %v739
    %v865 = vtanh.pop %v844
    %867 = vrot.lane.b32.xlu0 %v865, 126
    %v868 = vpop.permute.xlu0 %867
    %v870 = vmul.f32 %v863, %v868
    %872 = vrot.lane.b32.xlu0 %v870, 1
    %v873 = vpop.permute.xlu0 %872
    %v875 = vadd.f32 %v864, %v873
    %v876 = vtanh.pop %v875
    %878 = vrot.lane.b32.xlu0 %v876, 2
    %v879 = vpop.permute.xlu0 %878
    %v881 = vmul.f32 %v863, %v879
    %vm882 = vcmp.eq.s32.totalorder %v77, 5
    %884 = vset.pattern.permute.xlu0 3
    %885 = vperm.xlu0 %884, %v881
    %v886 = vpop.permute.xlu0 %885
    %v888 = vsel %vm882, %v886, %v752
    %889 = vmatpush.msra.mxu0 0.0
    %890 = vmatpush.msra.mxu0 0.0
    %891 = vmatpush.msra.mxu0 0.0
    %892 = vmatpush.msra.mxu0 0.0
    %893 = vmatpush.msra.mxu0 0.0
    %894 = vmatpush.msra.mxu0 0.0
    %895 = vmatpush.msra.mxu0 0.0
    %896 = vmatpush.msra.mxu0 0.0
    %897 = vmatpush.msra.mxu0 0.0
    %898 = vmatpush.msra.mxu0 0.0
    %899 = vmatpush.msra.mxu0 0.0
    %900 = vmatpush.msra.mxu0 0.0
    %901 = vmatpush.msra.mxu0 %v31
    %902 = vmatpush.msra.mxu0 %v30
    %903 = vmatpush.msra.mxu0 %v29
    %904 = vmatpush.msra.mxu0 %v28
    %905 = vmatmul.f32.gmra.mxu0 %v821
    %v906 = vpop.f32.mrf.mxu0
    %v907 = vadd.f32 0.0, %v906
    %908 = vdwg.mxu0
    %v910 = vrot.slane %v907, 4
    %v912 = vadd.f32 %v74, %v910
    %v913 = vxor.u32 %v912, 2147483648
    %v914 = vmul.f32 %v913, 1.442695
    %v915 = vpow.pop %v914
    %v916 = vadd.f32 %v915, 1.0
    %v917 = vrcp.pop %v916
    %v918 = vmul.f32 %v916, %v917
    %v919 = vsub.f32 1.0, %v918
    %v920 = vmul.f32 %v917, %v919
    %v921 = vadd.f32 %v917, %v920
    %vm922 = vweird.f32 %v916
    %vm923 = vweird.f32 %v917
    %vm924 = vmor %vm922, %vm923
    %v925 = vsel %vm924, %v917, %v921
    %v926 = vand.u32 2147483647, %v916
    %vm927 = vcmp.eq.f32.partialorder %v926, 8.507059e+37
    %v928 = vand.u32 %v916, 2147483648
    %v929 = vor.u32 1.1754944e-38, %v928
    %v930 = vsel %vm927, %v929, %v925
    %v931 = vmul.f32 1.0, %v930
    %v933 = vrot.slane %v810, 6
    %v935 = vmul.f32 %v931, %v933
    %v936 = vtanh.pop %v912
    %938 = vrot.lane.b32.xlu0 %v936, 64
    %v939 = vpop.permute.xlu0 %938
    %v941 = vmul.f32 %v931, %v939
    %943 = vrot.lane.b32.xlu0 %v941, 32
    %v944 = vpop.permute.xlu0 %943
    %v946 = vadd.f32 %v935, %v944
    %v947 = vtanh.pop %v946
    %949 = vrot.lane.b32.xlu0 %v947, 64
    %v950 = vpop.permute.xlu0 %949
    %v952 = vmul.f32 %v931, %v950
    %v954 = vrot.slane %v952, 4
    %955 = vrot.lane.b32.xlu0 %v954, 32
    %v956 = vpop.permute.xlu0 %955
    %v957 = vsel %vm78, %v956, 0
    %959 = vmatpush.msra.mxu0 0.0
    %960 = vmatpush.msra.mxu0 0.0
    %961 = vmatpush.msra.mxu0 0.0
    %962 = vmatpush.msra.mxu0 0.0
    %963 = vmatpush.msra.mxu0 0.0
    %964 = vmatpush.msra.mxu0 0.0
    %965 = vmatpush.msra.mxu0 0.0
    %966 = vmatpush.msra.mxu0 0.0
    %967 = vmatpush.msra.mxu0 0.0
    %968 = vmatpush.msra.mxu0 0.0
    %969 = vmatpush.msra.mxu0 0.0
    %970 = vmatpush.msra.mxu0 0.0
    %971 = vmatpush.msra.mxu0 %v36
    %972 = vmatpush.msra.mxu0 %v35
    %973 = vmatpush.msra.mxu0 %v34
    %974 = vmatpush.msra.mxu0 %v33
    %975 = vmatmul.f32.gmra.mxu0 %v957
    %v976 = vpop.f32.mrf.mxu0
    %v977 = vadd.f32 %v140, %v976
    %978 = vdwg.mxu0
    %v979 = vmul.f32 %v886, %v166
    %v980 = vadd.f32 %v977, %v979
    %v981 = vxor.u32 %v980, 2147483648
    %v982 = vmul.f32 %v981, 1.442695
    %v983 = vpow.pop %v982
    %v984 = vadd.f32 %v983, 1.0
    %v985 = vrcp.pop %v984
    %v986 = vmul.f32 %v984, %v985
    %v987 = vsub.f32 1.0, %v986
    %v988 = vmul.f32 %v985, %v987
    %v989 = vadd.f32 %v985, %v988
    %vm990 = vweird.f32 %v984
    %vm991 = vweird.f32 %v985
    %vm992 = vmor %vm990, %vm991
    %v993 = vsel %vm992, %v985, %v989
    %v994 = vand.u32 2147483647, %v984
    %vm995 = vcmp.eq.f32.partialorder %v994, 8.507059e+37
    %v996 = vand.u32 %v984, 2147483648
    %v997 = vor.u32 1.1754944e-38, %v996
    %v998 = vsel %vm995, %v997, %v993
    %v999 = vmul.f32 1.0, %v998
    %v1000 = vmul.f32 %v999, %v875
    %v1001 = vtanh.pop %v980
    %1003 = vrot.lane.b32.xlu0 %v1001, 126
    %v1004 = vpop.permute.xlu0 %1003
    %v1006 = vmul.f32 %v999, %v1004
    %1008 = vrot.lane.b32.xlu0 %v1006, 1
    %v1009 = vpop.permute.xlu0 %1008
    %v1011 = vadd.f32 %v1000, %v1009
    %v1012 = vtanh.pop %v1011
    %1014 = vrot.lane.b32.xlu0 %v1012, 2
    %v1015 = vpop.permute.xlu0 %1014
    %v1017 = vmul.f32 %v999, %v1015
    %vm1018 = vcmp.eq.s32.totalorder %v77, 6
    %1020 = vset.pattern.permute.xlu0 3
    %1021 = vperm.xlu0 %1020, %v1017
    %v1022 = vpop.permute.xlu0 %1021
    %v1024 = vsel %vm1018, %v1022, %v888
    %1025 = vmatpush.msra.mxu0 0.0
    %1026 = vmatpush.msra.mxu0 0.0
    %1027 = vmatpush.msra.mxu0 0.0
    %1028 = vmatpush.msra.mxu0 0.0
    %1029 = vmatpush.msra.mxu0 0.0
    %1030 = vmatpush.msra.mxu0 0.0
    %1031 = vmatpush.msra.mxu0 0.0
    %1032 = vmatpush.msra.mxu0 0.0
    %1033 = vmatpush.msra.mxu0 0.0
    %1034 = vmatpush.msra.mxu0 0.0
    %1035 = vmatpush.msra.mxu0 0.0
    %1036 = vmatpush.msra.mxu0 0.0
    %1037 = vmatpush.msra.mxu0 %v31
    %1038 = vmatpush.msra.mxu0 %v30
    %1039 = vmatpush.msra.mxu0 %v29
    %1040 = vmatpush.msra.mxu0 %v28
    %1041 = vmatmul.f32.gmra.mxu0 %v957
    %v1042 = vpop.f32.mrf.mxu0
    %v1043 = vadd.f32 0.0, %v1042
    %1044 = vdwg.mxu0
    %v1046 = vrot.slane %v1043, 2
    %v1048 = vadd.f32 %v74, %v1046
    %v1049 = vxor.u32 %v1048, 2147483648
    %v1050 = vmul.f32 %v1049, 1.442695
    %v1051 = vpow.pop %v1050
    %v1052 = vadd.f32 %v1051, 1.0
    %v1053 = vrcp.pop %v1052
    %v1054 = vmul.f32 %v1052, %v1053
    %v1055 = vsub.f32 1.0, %v1054
    %v1056 = vmul.f32 %v1053, %v1055
    %v1057 = vadd.f32 %v1053, %v1056
    %vm1058 = vweird.f32 %v1052
    %vm1059 = vweird.f32 %v1053
    %vm1060 = vmor %vm1058, %vm1059
    %v1061 = vsel %vm1060, %v1053, %v1057
    %v1062 = vand.u32 2147483647, %v1052
    %vm1063 = vcmp.eq.f32.partialorder %v1062, 8.507059e+37
    %v1064 = vand.u32 %v1052, 2147483648
    %v1065 = vor.u32 1.1754944e-38, %v1064
    %v1066 = vsel %vm1063, %v1065, %v1061
    %v1067 = vmul.f32 1.0, %v1066
    %v1069 = vrot.slane %v946, 6
    %v1071 = vmul.f32 %v1067, %v1069
    %v1072 = vtanh.pop %v1048
    %1074 = vrot.lane.b32.xlu0 %v1072, 64
    %v1075 = vpop.permute.xlu0 %1074
    %v1077 = vmul.f32 %v1067, %v1075
    %1079 = vrot.lane.b32.xlu0 %v1077, 32
    %v1080 = vpop.permute.xlu0 %1079
    %v1082 = vadd.f32 %v1071, %v1080
    %v1083 = vtanh.pop %v1082
    %1085 = vrot.lane.b32.xlu0 %v1083, 64
    %v1086 = vpop.permute.xlu0 %1085
    %v1088 = vmul.f32 %v1067, %v1086
    %v1090 = vrot.slane %v1088, 6
    %1091 = vrot.lane.b32.xlu0 %v1090, 32
    %v1092 = vpop.permute.xlu0 %1091
    %v1093 = vsel %vm78, %v1092, 0
    %1095 = vmatpush.msra.mxu0 0.0
    %1096 = vmatpush.msra.mxu0 0.0
    %1097 = vmatpush.msra.mxu0 0.0
    %1098 = vmatpush.msra.mxu0 0.0
    %1099 = vmatpush.msra.mxu0 0.0
    %1100 = vmatpush.msra.mxu0 0.0
    %1101 = vmatpush.msra.mxu0 0.0
    %1102 = vmatpush.msra.mxu0 0.0
    %1103 = vmatpush.msra.mxu0 0.0
    %1104 = vmatpush.msra.mxu0 0.0
    %1105 = vmatpush.msra.mxu0 0.0
    %1106 = vmatpush.msra.mxu0 0.0
    %1107 = vmatpush.msra.mxu0 %v36
    %1108 = vmatpush.msra.mxu0 %v35
    %1109 = vmatpush.msra.mxu0 %v34
    %1110 = vmatpush.msra.mxu0 %v33
    %1111 = vmatmul.f32.gmra.mxu0 %v1093
    %v1112 = vpop.f32.mrf.mxu0
    %v1113 = vadd.f32 %v140, %v1112
    %1114 = vdwg.mxu0
    %v1115 = vmul.f32 %v1022, %v166
    %v1116 = vadd.f32 %v1113, %v1115
    %v1117 = vxor.u32 %v1116, 2147483648
    %v1118 = vmul.f32 %v1117, 1.442695
    %v1119 = vpow.pop %v1118
    %v1120 = vadd.f32 %v1119, 1.0
    %v1121 = vrcp.pop %v1120
    %v1122 = vmul.f32 %v1120, %v1121
    %v1123 = vsub.f32 1.0, %v1122
    %v1124 = vmul.f32 %v1121, %v1123
    %v1125 = vadd.f32 %v1121, %v1124
    %vm1126 = vweird.f32 %v1120
    %vm1127 = vweird.f32 %v1121
    %vm1128 = vmor %vm1126, %vm1127
    %v1129 = vsel %vm1128, %v1121, %v1125
    %v1130 = vand.u32 2147483647, %v1120
    %vm1131 = vcmp.eq.f32.partialorder %v1130, 8.507059e+37
    %v1132 = vand.u32 %v1120, 2147483648
    %v1133 = vor.u32 1.1754944e-38, %v1132
    %v1134 = vsel %vm1131, %v1133, %v1129
    %v1135 = vmul.f32 1.0, %v1134
    %v1136 = vmul.f32 %v1135, %v1011
    %v1137 = vtanh.pop %v1116
    %1139 = vrot.lane.b32.xlu0 %v1137, 126
    %v1140 = vpop.permute.xlu0 %1139
    %v1142 = vmul.f32 %v1135, %v1140
    %1144 = vrot.lane.b32.xlu0 %v1142, 1
    %v1145 = vpop.permute.xlu0 %1144
    %v1147 = vadd.f32 %v1136, %v1145
    %v1148 = vtanh.pop %v1147
    %1150 = vrot.lane.b32.xlu0 %v1148, 2
    %v1151 = vpop.permute.xlu0 %1150
    %v1153 = vmul.f32 %v1135, %v1151
    %vm1154 = vcmp.eq.s32.totalorder %v77, 7
    %1156 = vset.pattern.permute.xlu0 3
    %1157 = vperm.xlu0 %1156, %v1153
    %v1158 = vpop.permute.xlu0 %1157
    %v1160 = vsel %vm1154, %v1158, %v1024
    %1161 = vst [vmem:[%s2] sm:$0x3] %v1160
    %1162 = vrot.lane.b32.xlu0 %v1088, 40
    %v1163 = vpop.permute.xlu0 %1162
    %vm1165 = vcmask 326726
    %1166 = vst.msk [vmem:[%s2 - $0x6] sm:$0xc0] %vm1165, %v1163
    %1168 = vrot.lane.b32.xlu0 %v1082, 8
    %v1169 = vpop.permute.xlu0 %1168
    %vm1171 = vcmask 589126
    %1172 = vst.msk [vmem:[%s2 - $0x6] sm:$0xc0] %vm1171, %v1169
    %1173 = vrot.lane.b32.xlu0 %v1153, 69
    %v1174 = vpop.permute.xlu0 %1173
    %vm1176 = vcmask 591424
    %1177 = vst.msk [vmem:[%s2] sm:$0x3] %vm1176, %v1174
    %1179 = vrot.lane.b32.xlu0 %v1147, 72
    %v1180 = vpop.permute.xlu0 %1179
    %vm1182 = vcmask 599624
    %1183 = vst.msk [vmem:[%s2] sm:$0x3] %vm1182, %v1180
    // Predicated region
    $region14: #{lstm_forward.1} parent=1 // pred_check
      _
    $region15: #{lstm_forward.1} parent=1 // pred_check_branch
      %1185 = sbr.rel (0) target = $region17
    $region16: #{lstm_forward.1} parent=1 // pred_region
      _
    $region17: #{lstm_forward.1} parent=1 // pred_fallthru
      _
    // Predicated region
    $region18: #{lstm_forward.1} parent=1 // pred_check
      _
    $region19: #{lstm_forward.1} parent=1 // pred_check_branch
      %1187 = sbr.rel (0) target = $region21
    $region20: #{lstm_forward.1} parent=1 // pred_region
      _
    $region21: #{lstm_forward.1} parent=1 // pred_fallthru
      _
    %1188 = vsyncpa [#allocation3], 1

</llo_original>
